<compile_context>
chip_gen: v5e
topology: v5e:2x2
jax: 0.10.0
libtpu: 0.0.40
codegen_flags: <defaults>
</compile_context>

<pallas_src>
import jax
import jax.numpy as jnp
from jax import lax
from jax.experimental import pallas as pl
from jax.experimental.pallas import tpu as pltpu

CIN, COUT, K = 3, 3, 3      # ConvTranspose2d(3, 3, 3)
PAD = K - 1                 # transposed conv == full conv with flipped weight
LANES = 128                 # lane-dense inner width


def deconv_kernel(w_ref, b_ref, x_ref, o_ref, xp_ref):
    # w_ref : SMEM (CIN*COUT*K*K,)  spatially-flipped ConvTranspose2d weight
    # b_ref : SMEM (COUT,)
    # x_ref : VMEM (1, CIN, H, W)   raw (unpadded) input tile
    # o_ref : VMEM (1, COUT, Ho, LANES)  lane-padded output tile
    # xp_ref: VMEM scratch (K*CIN, Hp, LANES); plane kw*CIN+ic holds channel ic
    #         of the zero-padded input, pre-shifted left by kw lanes, so that
    #         xp_ref[kw*CIN+ic, r, c] == x_pad[ic, r, c + kw].
    H = x_ref.shape[2]
    W = x_ref.shape[3]
    Ho = o_ref.shape[2]

    # In-kernel zero-pad + pre-shift (replaces wrapper-side jnp.pad).
    xp_ref[...] = jnp.zeros(xp_ref.shape, jnp.float32)
    for kw in range(K):
        off = PAD - kw                                  # lane shift by kw
        for ic in range(CIN):
            xp_ref[kw * CIN + ic, PAD:PAD + H, off:off + W] = x_ref[0, ic, :, :]

    # COUT accumulators stay live; each shifted slice is loaded once and
    # reused for all output channels (27 full-width slices instead of 81
    # masked 18-lane ones).
    accs = [jnp.zeros((Ho, LANES), jnp.float32) + b_ref[oc] for oc in range(COUT)]
    for ic in range(CIN):
        for kh in range(K):
            for kw in range(K):
                sl = xp_ref[kw * CIN + ic, kh:kh + Ho, :]      # (Ho, LANES)
                for oc in range(COUT):
                    w = w_ref[((ic * COUT + oc) * K + kh) * K + kw]
                    accs[oc] = accs[oc] + sl * w

    for oc in range(COUT):
        o_ref[0, oc, :, :] = accs[oc].astype(o_ref.dtype)      # unmasked, lane-dense


def conv_transpose2d(x, w, b):
    """x: (N, CIN, H, W); w: (CIN, COUT, K, K); b: (COUT,) -> (N, COUT, H+K-1, W+K-1)."""
    N, _, H, W = x.shape
    Ho, Wo = H + PAD, W + PAD
    Hp = H + 2 * PAD
    assert Wo <= LANES, "spatial width too large for single-lane-tile kernel"

    # Glue: spatial flip + flatten of the weight (indexed as scalars from SMEM).
    w_flat = w[:, :, ::-1, ::-1].reshape(-1).astype(jnp.float32)
    b = b.astype(jnp.float32)

    out_padded = pl.pallas_call(
        deconv_kernel,
        out_shape=jax.ShapeDtypeStruct((N, COUT, Ho, LANES), jnp.float32),
        grid=(N,),
        in_specs=[
            pl.BlockSpec(memory_space=pltpu.MemorySpace.SMEM),         # flipped weights
            pl.BlockSpec(memory_space=pltpu.MemorySpace.SMEM),         # bias
            pl.BlockSpec((1, CIN, H, W), lambda n: (n, 0, 0, 0)),       # raw input tile
        ],
        out_specs=pl.BlockSpec((1, COUT, Ho, LANES), lambda n: (n, 0, 0, 0)),
        scratch_shapes=[pltpu.VMEM((K * CIN, Hp, LANES), jnp.float32)],
        compiler_params=pltpu.CompilerParams(dimension_semantics=("parallel",)),
    )(w_flat, b, x.astype(jnp.float32))

    # Cheap XLA crop back to the true output width.
    return out_padded[:, :, :, :Wo]


def ref_conv_transpose2d(x, w, b):
    # Reference: transposed conv == conv(pad=K-1) with flipped+transposed weight.
    w_conv = jnp.transpose(w, (1, 0, 2, 3))[:, :, ::-1, ::-1]  # (COUT, CIN, K, K)
    y = lax.conv_general_dilated(
        x, w_conv, window_strides=(1, 1),
        padding=[(K - 1, K - 1), (K - 1, K - 1)],
        dimension_numbers=("NCHW", "OIHW", "NCHW"))
    return y + b[None, :, None, None]


if __name__ == "__main__":
    key = jax.random.PRNGKey(0)
    kx, kw, kb = jax.random.split(key, 3)

    # Small shapes consistent with the module: N=2, C_in=3, 16x16 spatial.
    x = jax.random.normal(kx, (2, CIN, 16, 16), dtype=jnp.float32)

    # Deterministic parameter init (PyTorch-style uniform(-1/sqrt(fan_in), +)).
    fan_in = CIN * K * K
    bound = 1.0 / (fan_in ** 0.5)
    w = jax.random.uniform(kw, (CIN, COUT, K, K), jnp.float32, -bound, bound)
    b = jax.random.uniform(kb, (COUT,), jnp.float32, -bound, bound)

    out = conv_transpose2d(x, w, b)
    out = jax.block_until_ready(out)

    ref = ref_conv_transpose2d(x, w, b)
    assert out.shape == (2, COUT, 18, 18), out.shape
    assert jnp.allclose(out, ref, atol=1e-4, rtol=1e-4), "mismatch vs reference"

    print("KERNEL_OK")
</pallas_src>

<mosaic_0001>
module attributes {stable_mosaic.version = 11 : i64} {
  func.func @deconv_kernel(%arg0: i32, %arg1: memref<81xf32, #tpu.memory_space<smem>>, %arg2: memref<3xf32, #tpu.memory_space<smem>>, %arg3: memref<1x3x16x16xf32, #tpu.memory_space<vmem>>, %arg4: memref<1x3x18x128xf32, #tpu.memory_space<vmem>>, %arg5: memref<9x20x128xf32, #tpu.memory_space<vmem>>) attributes {dimension_semantics = [#tpu.dimension_semantics<parallel>], iteration_bounds = array<i64: 2>, scalar_prefetch = 0 : i64, scratch_operands = 1 : i64, tpu.core_type = #tpu.core_type<tc>, window_params = [{transform_indices = @transform_0, window_bounds = array<i64: 81>}, {transform_indices = @transform_1, window_bounds = array<i64: 3>}, {transform_indices = @transform_2, window_bounds = array<i64: 1, 3, 16, 16>}, {transform_indices = @transform_3, window_bounds = array<i64: 1, 3, 18, 128>}]} {
    %cst = arith.constant 0.000000e+00 : f32
    %0 = vector.broadcast %cst : f32 to vector<9x20x128xf32>
    %c0 = arith.constant 0 : index
    %c0_0 = arith.constant 0 : index
    %c0_1 = arith.constant 0 : index
    %1 = vector.load %arg5[%c0, %c0_0, %c0_1] : memref<9x20x128xf32, #tpu.memory_space<vmem>>, vector<9x20x128xf32>
    tpu.vector_store %arg5[%c0, %c0_0, %c0_1], %0 {strides = array<i32>} : memref<9x20x128xf32, #tpu.memory_space<vmem>>, vector<9x20x128xf32>,
    %c0_2 = arith.constant 0 : index
    %c0_3 = arith.constant 0 : index
    %c0_4 = arith.constant 0 : index
    %c0_5 = arith.constant 0 : index
    %2 = vector.load %arg3[%c0_2, %c0_3, %c0_4, %c0_5] : memref<1x3x16x16xf32, #tpu.memory_space<vmem>>, vector<1x1x16x16xf32>
    %3 = vector.shape_cast %2 : vector<1x1x16x16xf32> to vector<16x16xf32>
    %c0_6 = arith.constant 0 : index
    %c2 = arith.constant 2 : index
    %c2_7 = arith.constant 2 : index
    %4 = vector.load %arg5[%c0_6, %c2, %c2_7] : memref<9x20x128xf32, #tpu.memory_space<vmem>>, vector<1x16x16xf32>
    %5 = vector.shape_cast %4 : vector<1x16x16xf32> to vector<16x16xf32>
    %6 = vector.shape_cast %3 : vector<16x16xf32> to vector<1x16x16xf32>
    tpu.vector_store %arg5[%c0_6, %c2, %c2_7], %6 {strides = array<i32>} : memref<9x20x128xf32, #tpu.memory_space<vmem>>, vector<1x16x16xf32>,
    %c0_8 = arith.constant 0 : index
    %c1 = arith.constant 1 : index
    %c0_9 = arith.constant 0 : index
    %c0_10 = arith.constant 0 : index
    %7 = vector.load %arg3[%c0_8, %c1, %c0_9, %c0_10] : memref<1x3x16x16xf32, #tpu.memory_space<vmem>>, vector<1x1x16x16xf32>
    %8 = vector.shape_cast %7 : vector<1x1x16x16xf32> to vector<16x16xf32>
    %c1_11 = arith.constant 1 : index
    %c2_12 = arith.constant 2 : index
    %c2_13 = arith.constant 2 : index
    %9 = vector.load %arg5[%c1_11, %c2_12, %c2_13] : memref<9x20x128xf32, #tpu.memory_space<vmem>>, vector<1x16x16xf32>
    %10 = vector.shape_cast %9 : vector<1x16x16xf32> to vector<16x16xf32>
    %11 = vector.shape_cast %8 : vector<16x16xf32> to vector<1x16x16xf32>
    tpu.vector_store %arg5[%c1_11, %c2_12, %c2_13], %11 {strides = array<i32>} : memref<9x20x128xf32, #tpu.memory_space<vmem>>, vector<1x16x16xf32>,
    %c0_14 = arith.constant 0 : index
    %c2_15 = arith.constant 2 : index
    %c0_16 = arith.constant 0 : index
    %c0_17 = arith.constant 0 : index
    %12 = vector.load %arg3[%c0_14, %c2_15, %c0_16, %c0_17] : memref<1x3x16x16xf32, #tpu.memory_space<vmem>>, vector<1x1x16x16xf32>
    %13 = vector.shape_cast %12 : vector<1x1x16x16xf32> to vector<16x16xf32>
    %c2_18 = arith.constant 2 : index
    %c2_19 = arith.constant 2 : index
    %c2_20 = arith.constant 2 : index
    %14 = vector.load %arg5[%c2_18, %c2_19, %c2_20] : memref<9x20x128xf32, #tpu.memory_space<vmem>>, vector<1x16x16xf32>
    %15 = vector.shape_cast %14 : vector<1x16x16xf32> to vector<16x16xf32>
    %16 = vector.shape_cast %13 : vector<16x16xf32> to vector<1x16x16xf32>
    tpu.vector_store %arg5[%c2_18, %c2_19, %c2_20], %16 {strides = array<i32>} : memref<9x20x128xf32, #tpu.memory_space<vmem>>, vector<1x16x16xf32>,
    %c0_21 = arith.constant 0 : index
    %c0_22 = arith.constant 0 : index
    %c0_23 = arith.constant 0 : index
    %c0_24 = arith.constant 0 : index
    %17 = vector.load %arg3[%c0_21, %c0_22, %c0_23, %c0_24] : memref<1x3x16x16xf32, #tpu.memory_space<vmem>>, vector<1x1x16x16xf32>
    %18 = vector.shape_cast %17 : vector<1x1x16x16xf32> to vector<16x16xf32>
    %c3 = arith.constant 3 : index
    %c2_25 = arith.constant 2 : index
    %c1_26 = arith.constant 1 : index
    %19 = vector.load %arg5[%c3, %c2_25, %c1_26] : memref<9x20x128xf32, #tpu.memory_space<vmem>>, vector<1x16x16xf32>
    %20 = vector.shape_cast %19 : vector<1x16x16xf32> to vector<16x16xf32>
    %21 = vector.shape_cast %18 : vector<16x16xf32> to vector<1x16x16xf32>
    tpu.vector_store %arg5[%c3, %c2_25, %c1_26], %21 {strides = array<i32>} : memref<9x20x128xf32, #tpu.memory_space<vmem>>, vector<1x16x16xf32>,
    %c0_27 = arith.constant 0 : index
    %c1_28 = arith.constant 1 : index
    %c0_29 = arith.constant 0 : index
    %c0_30 = arith.constant 0 : index
    %22 = vector.load %arg3[%c0_27, %c1_28, %c0_29, %c0_30] : memref<1x3x16x16xf32, #tpu.memory_space<vmem>>, vector<1x1x16x16xf32>
    %23 = vector.shape_cast %22 : vector<1x1x16x16xf32> to vector<16x16xf32>
    %c4 = arith.constant 4 : index
    %c2_31 = arith.constant 2 : index
    %c1_32 = arith.constant 1 : index
    %24 = vector.load %arg5[%c4, %c2_31, %c1_32] : memref<9x20x128xf32, #tpu.memory_space<vmem>>, vector<1x16x16xf32>
    %25 = vector.shape_cast %24 : vector<1x16x16xf32> to vector<16x16xf32>
    %26 = vector.shape_cast %23 : vector<16x16xf32> to vector<1x16x16xf32>
    tpu.vector_store %arg5[%c4, %c2_31, %c1_32], %26 {strides = array<i32>} : memref<9x20x128xf32, #tpu.memory_space<vmem>>, vector<1x16x16xf32>,
    %c0_33 = arith.constant 0 : index
    %c2_34 = arith.constant 2 : index
    %c0_35 = arith.constant 0 : index
    %c0_36 = arith.constant 0 : index
    %27 = vector.load %arg3[%c0_33, %c2_34, %c0_35, %c0_36] : memref<1x3x16x16xf32, #tpu.memory_space<vmem>>, vector<1x1x16x16xf32>
    %28 = vector.shape_cast %27 : vector<1x1x16x16xf32> to vector<16x16xf32>
    %c5 = arith.constant 5 : index
    %c2_37 = arith.constant 2 : index
    %c1_38 = arith.constant 1 : index
    %29 = vector.load %arg5[%c5, %c2_37, %c1_38] : memref<9x20x128xf32, #tpu.memory_space<vmem>>, vector<1x16x16xf32>
    %30 = vector.shape_cast %29 : vector<1x16x16xf32> to vector<16x16xf32>
    %31 = vector.shape_cast %28 : vector<16x16xf32> to vector<1x16x16xf32>
    tpu.vector_store %arg5[%c5, %c2_37, %c1_38], %31 {strides = array<i32>} : memref<9x20x128xf32, #tpu.memory_space<vmem>>, vector<1x16x16xf32>,
    %c0_39 = arith.constant 0 : index
    %c0_40 = arith.constant 0 : index
    %c0_41 = arith.constant 0 : index
    %c0_42 = arith.constant 0 : index
    %32 = vector.load %arg3[%c0_39, %c0_40, %c0_41, %c0_42] : memref<1x3x16x16xf32, #tpu.memory_space<vmem>>, vector<1x1x16x16xf32>
    %33 = vector.shape_cast %32 : vector<1x1x16x16xf32> to vector<16x16xf32>
    %c6 = arith.constant 6 : index
    %c2_43 = arith.constant 2 : index
    %c0_44 = arith.constant 0 : index
    %34 = vector.load %arg5[%c6, %c2_43, %c0_44] : memref<9x20x128xf32, #tpu.memory_space<vmem>>, vector<1x16x16xf32>
    %35 = vector.shape_cast %34 : vector<1x16x16xf32> to vector<16x16xf32>
    %36 = vector.shape_cast %33 : vector<16x16xf32> to vector<1x16x16xf32>
    tpu.vector_store %arg5[%c6, %c2_43, %c0_44], %36 {strides = array<i32>} : memref<9x20x128xf32, #tpu.memory_space<vmem>>, vector<1x16x16xf32>,
    %c0_45 = arith.constant 0 : index
    %c1_46 = arith.constant 1 : index
    %c0_47 = arith.constant 0 : index
    %c0_48 = arith.constant 0 : index
    %37 = vector.load %arg3[%c0_45, %c1_46, %c0_47, %c0_48] : memref<1x3x16x16xf32, #tpu.memory_space<vmem>>, vector<1x1x16x16xf32>
    %38 = vector.shape_cast %37 : vector<1x1x16x16xf32> to vector<16x16xf32>
    %c7 = arith.constant 7 : index
    %c2_49 = arith.constant 2 : index
    %c0_50 = arith.constant 0 : index
    %39 = vector.load %arg5[%c7, %c2_49, %c0_50] : memref<9x20x128xf32, #tpu.memory_space<vmem>>, vector<1x16x16xf32>
    %40 = vector.shape_cast %39 : vector<1x16x16xf32> to vector<16x16xf32>
    %41 = vector.shape_cast %38 : vector<16x16xf32> to vector<1x16x16xf32>
    tpu.vector_store %arg5[%c7, %c2_49, %c0_50], %41 {strides = array<i32>} : memref<9x20x128xf32, #tpu.memory_space<vmem>>, vector<1x16x16xf32>,
    %c0_51 = arith.constant 0 : index
    %c2_52 = arith.constant 2 : index
    %c0_53 = arith.constant 0 : index
    %c0_54 = arith.constant 0 : index
    %42 = vector.load %arg3[%c0_51, %c2_52, %c0_53, %c0_54] : memref<1x3x16x16xf32, #tpu.memory_space<vmem>>, vector<1x1x16x16xf32>
    %43 = vector.shape_cast %42 : vector<1x1x16x16xf32> to vector<16x16xf32>
    %c8 = arith.constant 8 : index
    %c2_55 = arith.constant 2 : index
    %c0_56 = arith.constant 0 : index
    %44 = vector.load %arg5[%c8, %c2_55, %c0_56] : memref<9x20x128xf32, #tpu.memory_space<vmem>>, vector<1x16x16xf32>
    %45 = vector.shape_cast %44 : vector<1x16x16xf32> to vector<16x16xf32>
    %46 = vector.shape_cast %43 : vector<16x16xf32> to vector<1x16x16xf32>
    tpu.vector_store %arg5[%c8, %c2_55, %c0_56], %46 {strides = array<i32>} : memref<9x20x128xf32, #tpu.memory_space<vmem>>, vector<1x16x16xf32>,
    %cst_57 = arith.constant 0.000000e+00 : f32
    %47 = vector.broadcast %cst_57 : f32 to vector<18x128xf32>
    %c0_58 = arith.constant 0 : index
    %48 = memref.load %arg2[%c0_58] : memref<3xf32, #tpu.memory_space<smem>>
    %49 = vector.broadcast %48 : f32 to vector<18x128xf32>
    %50 = arith.addf %47, %49 : vector<18x128xf32>
    %cst_59 = arith.constant 0.000000e+00 : f32
    %51 = vector.broadcast %cst_59 : f32 to vector<18x128xf32>
    %c1_60 = arith.constant 1 : index
    %52 = memref.load %arg2[%c1_60] : memref<3xf32, #tpu.memory_space<smem>>
    %53 = vector.broadcast %52 : f32 to vector<18x128xf32>
    %54 = arith.addf %51, %53 : vector<18x128xf32>
    %cst_61 = arith.constant 0.000000e+00 : f32
    %55 = vector.broadcast %cst_61 : f32 to vector<18x128xf32>
    %c2_62 = arith.constant 2 : index
    %56 = memref.load %arg2[%c2_62] : memref<3xf32, #tpu.memory_space<smem>>
    %57 = vector.broadcast %56 : f32 to vector<18x128xf32>
    %58 = arith.addf %55, %57 : vector<18x128xf32>
    %c0_63 = arith.constant 0 : index
    %c0_64 = arith.constant 0 : index
    %c0_65 = arith.constant 0 : index
    %59 = vector.load %arg5[%c0_63, %c0_64, %c0_65] : memref<9x20x128xf32, #tpu.memory_space<vmem>>, vector<1x18x128xf32>
    %60 = vector.shape_cast %59 : vector<1x18x128xf32> to vector<18x128xf32>
    %c0_66 = arith.constant 0 : index
    %61 = memref.load %arg1[%c0_66] : memref<81xf32, #tpu.memory_space<smem>>
    %62 = vector.broadcast %61 : f32 to vector<18x128xf32>
    %63 = arith.mulf %60, %62 : vector<18x128xf32>
    %64 = arith.addf %50, %63 : vector<18x128xf32>
    %c9 = arith.constant 9 : index
    %65 = memref.load %arg1[%c9] : memref<81xf32, #tpu.memory_space<smem>>
    %66 = vector.broadcast %65 : f32 to vector<18x128xf32>
    %67 = arith.mulf %60, %66 : vector<18x128xf32>
    %68 = arith.addf %54, %67 : vector<18x128xf32>
    %c18 = arith.constant 18 : index
    %69 = memref.load %arg1[%c18] : memref<81xf32, #tpu.memory_space<smem>>
    %70 = vector.broadcast %69 : f32 to vector<18x128xf32>
    %71 = arith.mulf %60, %70 : vector<18x128xf32>
    %72 = arith.addf %58, %71 : vector<18x128xf32>
    %c3_67 = arith.constant 3 : index
    %c0_68 = arith.constant 0 : index
    %c0_69 = arith.constant 0 : index
    %73 = vector.load %arg5[%c3_67, %c0_68, %c0_69] : memref<9x20x128xf32, #tpu.memory_space<vmem>>, vector<1x18x128xf32>
    %74 = vector.shape_cast %73 : vector<1x18x128xf32> to vector<18x128xf32>
    %c1_70 = arith.constant 1 : index
    %75 = memref.load %arg1[%c1_70] : memref<81xf32, #tpu.memory_space<smem>>
    %76 = vector.broadcast %75 : f32 to vector<18x128xf32>
    %77 = arith.mulf %74, %76 : vector<18x128xf32>
    %78 = arith.addf %64, %77 : vector<18x128xf32>
    %c10 = arith.constant 10 : index
    %79 = memref.load %arg1[%c10] : memref<81xf32, #tpu.memory_space<smem>>
    %80 = vector.broadcast %79 : f32 to vector<18x128xf32>
    %81 = arith.mulf %74, %80 : vector<18x128xf32>
    %82 = arith.addf %68, %81 : vector<18x128xf32>
    %c19 = arith.constant 19 : index
    %83 = memref.load %arg1[%c19] : memref<81xf32, #tpu.memory_space<smem>>
    %84 = vector.broadcast %83 : f32 to vector<18x128xf32>
    %85 = arith.mulf %74, %84 : vector<18x128xf32>
    %86 = arith.addf %72, %85 : vector<18x128xf32>
    %c6_71 = arith.constant 6 : index
    %c0_72 = arith.constant 0 : index
    %c0_73 = arith.constant 0 : index
    %87 = vector.load %arg5[%c6_71, %c0_72, %c0_73] : memref<9x20x128xf32, #tpu.memory_space<vmem>>, vector<1x18x128xf32>
    %88 = vector.shape_cast %87 : vector<1x18x128xf32> to vector<18x128xf32>
    %c2_74 = arith.constant 2 : index
    %89 = memref.load %arg1[%c2_74] : memref<81xf32, #tpu.memory_space<smem>>
    %90 = vector.broadcast %89 : f32 to vector<18x128xf32>
    %91 = arith.mulf %88, %90 : vector<18x128xf32>
    %92 = arith.addf %78, %91 : vector<18x128xf32>
    %c11 = arith.constant 11 : index
    %93 = memref.load %arg1[%c11] : memref<81xf32, #tpu.memory_space<smem>>
    %94 = vector.broadcast %93 : f32 to vector<18x128xf32>
    %95 = arith.mulf %88, %94 : vector<18x128xf32>
    %96 = arith.addf %82, %95 : vector<18x128xf32>
    %c20 = arith.constant 20 : index
    %97 = memref.load %arg1[%c20] : memref<81xf32, #tpu.memory_space<smem>>
    %98 = vector.broadcast %97 : f32 to vector<18x128xf32>
    %99 = arith.mulf %88, %98 : vector<18x128xf32>
    %100 = arith.addf %86, %99 : vector<18x128xf32>
    %c0_75 = arith.constant 0 : index
    %c1_76 = arith.constant 1 : index
    %c0_77 = arith.constant 0 : index
    %101 = vector.load %arg5[%c0_75, %c1_76, %c0_77] : memref<9x20x128xf32, #tpu.memory_space<vmem>>, vector<1x18x128xf32>
    %102 = vector.shape_cast %101 : vector<1x18x128xf32> to vector<18x128xf32>
    %c3_78 = arith.constant 3 : index
    %103 = memref.load %arg1[%c3_78] : memref<81xf32, #tpu.memory_space<smem>>
    %104 = vector.broadcast %103 : f32 to vector<18x128xf32>
    %105 = arith.mulf %102, %104 : vector<18x128xf32>
    %106 = arith.addf %92, %105 : vector<18x128xf32>
    %c12 = arith.constant 12 : index
    %107 = memref.load %arg1[%c12] : memref<81xf32, #tpu.memory_space<smem>>
    %108 = vector.broadcast %107 : f32 to vector<18x128xf32>
    %109 = arith.mulf %102, %108 : vector<18x128xf32>
    %110 = arith.addf %96, %109 : vector<18x128xf32>
    %c21 = arith.constant 21 : index
    %111 = memref.load %arg1[%c21] : memref<81xf32, #tpu.memory_space<smem>>
    %112 = vector.broadcast %111 : f32 to vector<18x128xf32>
    %113 = arith.mulf %102, %112 : vector<18x128xf32>
    %114 = arith.addf %100, %113 : vector<18x128xf32>
    %c3_79 = arith.constant 3 : index
    %c1_80 = arith.constant 1 : index
    %c0_81 = arith.constant 0 : index
    %115 = vector.load %arg5[%c3_79, %c1_80, %c0_81] : memref<9x20x128xf32, #tpu.memory_space<vmem>>, vector<1x18x128xf32>
    %116 = vector.shape_cast %115 : vector<1x18x128xf32> to vector<18x128xf32>
    %c4_82 = arith.constant 4 : index
    %117 = memref.load %arg1[%c4_82] : memref<81xf32, #tpu.memory_space<smem>>
    %118 = vector.broadcast %117 : f32 to vector<18x128xf32>
    %119 = arith.mulf %116, %118 : vector<18x128xf32>
    %120 = arith.addf %106, %119 : vector<18x128xf32>
    %c13 = arith.constant 13 : index
    %121 = memref.load %arg1[%c13] : memref<81xf32, #tpu.memory_space<smem>>
    %122 = vector.broadcast %121 : f32 to vector<18x128xf32>
    %123 = arith.mulf %116, %122 : vector<18x128xf32>
    %124 = arith.addf %110, %123 : vector<18x128xf32>
    %c22 = arith.constant 22 : index
    %125 = memref.load %arg1[%c22] : memref<81xf32, #tpu.memory_space<smem>>
    %126 = vector.broadcast %125 : f32 to vector<18x128xf32>
    %127 = arith.mulf %116, %126 : vector<18x128xf32>
    %128 = arith.addf %114, %127 : vector<18x128xf32>
    %c6_83 = arith.constant 6 : index
    %c1_84 = arith.constant 1 : index
    %c0_85 = arith.constant 0 : index
    %129 = vector.load %arg5[%c6_83, %c1_84, %c0_85] : memref<9x20x128xf32, #tpu.memory_space<vmem>>, vector<1x18x128xf32>
    %130 = vector.shape_cast %129 : vector<1x18x128xf32> to vector<18x128xf32>
    %c5_86 = arith.constant 5 : index
    %131 = memref.load %arg1[%c5_86] : memref<81xf32, #tpu.memory_space<smem>>
    %132 = vector.broadcast %131 : f32 to vector<18x128xf32>
    %133 = arith.mulf %130, %132 : vector<18x128xf32>
    %134 = arith.addf %120, %133 : vector<18x128xf32>
    %c14 = arith.constant 14 : index
    %135 = memref.load %arg1[%c14] : memref<81xf32, #tpu.memory_space<smem>>
    %136 = vector.broadcast %135 : f32 to vector<18x128xf32>
    %137 = arith.mulf %130, %136 : vector<18x128xf32>
    %138 = arith.addf %124, %137 : vector<18x128xf32>
    %c23 = arith.constant 23 : index
    %139 = memref.load %arg1[%c23] : memref<81xf32, #tpu.memory_space<smem>>
    %140 = vector.broadcast %139 : f32 to vector<18x128xf32>
    %141 = arith.mulf %130, %140 : vector<18x128xf32>
    %142 = arith.addf %128, %141 : vector<18x128xf32>
    %c0_87 = arith.constant 0 : index
    %c2_88 = arith.constant 2 : index
    %c0_89 = arith.constant 0 : index
    %143 = vector.load %arg5[%c0_87, %c2_88, %c0_89] : memref<9x20x128xf32, #tpu.memory_space<vmem>>, vector<1x18x128xf32>
    %144 = vector.shape_cast %143 : vector<1x18x128xf32> to vector<18x128xf32>
    %c6_90 = arith.constant 6 : index
    %145 = memref.load %arg1[%c6_90] : memref<81xf32, #tpu.memory_space<smem>>
    %146 = vector.broadcast %145 : f32 to vector<18x128xf32>
    %147 = arith.mulf %144, %146 : vector<18x128xf32>
    %148 = arith.addf %134, %147 : vector<18x128xf32>
    %c15 = arith.constant 15 : index
    %149 = memref.load %arg1[%c15] : memref<81xf32, #tpu.memory_space<smem>>
    %150 = vector.broadcast %149 : f32 to vector<18x128xf32>
    %151 = arith.mulf %144, %150 : vector<18x128xf32>
    %152 = arith.addf %138, %151 : vector<18x128xf32>
    %c24 = arith.constant 24 : index
    %153 = memref.load %arg1[%c24] : memref<81xf32, #tpu.memory_space<smem>>
    %154 = vector.broadcast %153 : f32 to vector<18x128xf32>
    %155 = arith.mulf %144, %154 : vector<18x128xf32>
    %156 = arith.addf %142, %155 : vector<18x128xf32>
    %c3_91 = arith.constant 3 : index
    %c2_92 = arith.constant 2 : index
    %c0_93 = arith.constant 0 : index
    %157 = vector.load %arg5[%c3_91, %c2_92, %c0_93] : memref<9x20x128xf32, #tpu.memory_space<vmem>>, vector<1x18x128xf32>
    %158 = vector.shape_cast %157 : vector<1x18x128xf32> to vector<18x128xf32>
    %c7_94 = arith.constant 7 : index
    %159 = memref.load %arg1[%c7_94] : memref<81xf32, #tpu.memory_space<smem>>
    %160 = vector.broadcast %159 : f32 to vector<18x128xf32>
    %161 = arith.mulf %158, %160 : vector<18x128xf32>
    %162 = arith.addf %148, %161 : vector<18x128xf32>
    %c16 = arith.constant 16 : index
    %163 = memref.load %arg1[%c16] : memref<81xf32, #tpu.memory_space<smem>>
    %164 = vector.broadcast %163 : f32 to vector<18x128xf32>
    %165 = arith.mulf %158, %164 : vector<18x128xf32>
    %166 = arith.addf %152, %165 : vector<18x128xf32>
    %c25 = arith.constant 25 : index
    %167 = memref.load %arg1[%c25] : memref<81xf32, #tpu.memory_space<smem>>
    %168 = vector.broadcast %167 : f32 to vector<18x128xf32>
    %169 = arith.mulf %158, %168 : vector<18x128xf32>
    %170 = arith.addf %156, %169 : vector<18x128xf32>
    %c6_95 = arith.constant 6 : index
    %c2_96 = arith.constant 2 : index
    %c0_97 = arith.constant 0 : index
    %171 = vector.load %arg5[%c6_95, %c2_96, %c0_97] : memref<9x20x128xf32, #tpu.memory_space<vmem>>, vector<1x18x128xf32>
    %172 = vector.shape_cast %171 : vector<1x18x128xf32> to vector<18x128xf32>
    %c8_98 = arith.constant 8 : index
    %173 = memref.load %arg1[%c8_98] : memref<81xf32, #tpu.memory_space<smem>>
    %174 = vector.broadcast %173 : f32 to vector<18x128xf32>
    %175 = arith.mulf %172, %174 : vector<18x128xf32>
    %176 = arith.addf %162, %175 : vector<18x128xf32>
    %c17 = arith.constant 17 : index
    %177 = memref.load %arg1[%c17] : memref<81xf32, #tpu.memory_space<smem>>
    %178 = vector.broadcast %177 : f32 to vector<18x128xf32>
    %179 = arith.mulf %172, %178 : vector<18x128xf32>
    %180 = arith.addf %166, %179 : vector<18x128xf32>
    %c26 = arith.constant 26 : index
    %181 = memref.load %arg1[%c26] : memref<81xf32, #tpu.memory_space<smem>>
    %182 = vector.broadcast %181 : f32 to vector<18x128xf32>
    %183 = arith.mulf %172, %182 : vector<18x128xf32>
    %184 = arith.addf %170, %183 : vector<18x128xf32>
    %c1_99 = arith.constant 1 : index
    %c0_100 = arith.constant 0 : index
    %c0_101 = arith.constant 0 : index
    %185 = vector.load %arg5[%c1_99, %c0_100, %c0_101] : memref<9x20x128xf32, #tpu.memory_space<vmem>>, vector<1x18x128xf32>
    %186 = vector.shape_cast %185 : vector<1x18x128xf32> to vector<18x128xf32>
    %c27 = arith.constant 27 : index
    %187 = memref.load %arg1[%c27] : memref<81xf32, #tpu.memory_space<smem>>
    %188 = vector.broadcast %187 : f32 to vector<18x128xf32>
    %189 = arith.mulf %186, %188 : vector<18x128xf32>
    %190 = arith.addf %176, %189 : vector<18x128xf32>
    %c36 = arith.constant 36 : index
    %191 = memref.load %arg1[%c36] : memref<81xf32, #tpu.memory_space<smem>>
    %192 = vector.broadcast %191 : f32 to vector<18x128xf32>
    %193 = arith.mulf %186, %192 : vector<18x128xf32>
    %194 = arith.addf %180, %193 : vector<18x128xf32>
    %c45 = arith.constant 45 : index
    %195 = memref.load %arg1[%c45] : memref<81xf32, #tpu.memory_space<smem>>
    %196 = vector.broadcast %195 : f32 to vector<18x128xf32>
    %197 = arith.mulf %186, %196 : vector<18x128xf32>
    %198 = arith.addf %184, %197 : vector<18x128xf32>
    %c4_102 = arith.constant 4 : index
    %c0_103 = arith.constant 0 : index
    %c0_104 = arith.constant 0 : index
    %199 = vector.load %arg5[%c4_102, %c0_103, %c0_104] : memref<9x20x128xf32, #tpu.memory_space<vmem>>, vector<1x18x128xf32>
    %200 = vector.shape_cast %199 : vector<1x18x128xf32> to vector<18x128xf32>
    %c28 = arith.constant 28 : index
    %201 = memref.load %arg1[%c28] : memref<81xf32, #tpu.memory_space<smem>>
    %202 = vector.broadcast %201 : f32 to vector<18x128xf32>
    %203 = arith.mulf %200, %202 : vector<18x128xf32>
    %204 = arith.addf %190, %203 : vector<18x128xf32>
    %c37 = arith.constant 37 : index
    %205 = memref.load %arg1[%c37] : memref<81xf32, #tpu.memory_space<smem>>
    %206 = vector.broadcast %205 : f32 to vector<18x128xf32>
    %207 = arith.mulf %200, %206 : vector<18x128xf32>
    %208 = arith.addf %194, %207 : vector<18x128xf32>
    %c46 = arith.constant 46 : index
    %209 = memref.load %arg1[%c46] : memref<81xf32, #tpu.memory_space<smem>>
    %210 = vector.broadcast %209 : f32 to vector<18x128xf32>
    %211 = arith.mulf %200, %210 : vector<18x128xf32>
    %212 = arith.addf %198, %211 : vector<18x128xf32>
    %c7_105 = arith.constant 7 : index
    %c0_106 = arith.constant 0 : index
    %c0_107 = arith.constant 0 : index
    %213 = vector.load %arg5[%c7_105, %c0_106, %c0_107] : memref<9x20x128xf32, #tpu.memory_space<vmem>>, vector<1x18x128xf32>
    %214 = vector.shape_cast %213 : vector<1x18x128xf32> to vector<18x128xf32>
    %c29 = arith.constant 29 : index
    %215 = memref.load %arg1[%c29] : memref<81xf32, #tpu.memory_space<smem>>
    %216 = vector.broadcast %215 : f32 to vector<18x128xf32>
    %217 = arith.mulf %214, %216 : vector<18x128xf32>
    %218 = arith.addf %204, %217 : vector<18x128xf32>
    %c38 = arith.constant 38 : index
    %219 = memref.load %arg1[%c38] : memref<81xf32, #tpu.memory_space<smem>>
    %220 = vector.broadcast %219 : f32 to vector<18x128xf32>
    %221 = arith.mulf %214, %220 : vector<18x128xf32>
    %222 = arith.addf %208, %221 : vector<18x128xf32>
    %c47 = arith.constant 47 : index
    %223 = memref.load %arg1[%c47] : memref<81xf32, #tpu.memory_space<smem>>
    %224 = vector.broadcast %223 : f32 to vector<18x128xf32>
    %225 = arith.mulf %214, %224 : vector<18x128xf32>
    %226 = arith.addf %212, %225 : vector<18x128xf32>
    %c1_108 = arith.constant 1 : index
    %c1_109 = arith.constant 1 : index
    %c0_110 = arith.constant 0 : index
    %227 = vector.load %arg5[%c1_108, %c1_109, %c0_110] : memref<9x20x128xf32, #tpu.memory_space<vmem>>, vector<1x18x128xf32>
    %228 = vector.shape_cast %227 : vector<1x18x128xf32> to vector<18x128xf32>
    %c30 = arith.constant 30 : index
    %229 = memref.load %arg1[%c30] : memref<81xf32, #tpu.memory_space<smem>>
    %230 = vector.broadcast %229 : f32 to vector<18x128xf32>
    %231 = arith.mulf %228, %230 : vector<18x128xf32>
    %232 = arith.addf %218, %231 : vector<18x128xf32>
    %c39 = arith.constant 39 : index
    %233 = memref.load %arg1[%c39] : memref<81xf32, #tpu.memory_space<smem>>
    %234 = vector.broadcast %233 : f32 to vector<18x128xf32>
    %235 = arith.mulf %228, %234 : vector<18x128xf32>
    %236 = arith.addf %222, %235 : vector<18x128xf32>
    %c48 = arith.constant 48 : index
    %237 = memref.load %arg1[%c48] : memref<81xf32, #tpu.memory_space<smem>>
    %238 = vector.broadcast %237 : f32 to vector<18x128xf32>
    %239 = arith.mulf %228, %238 : vector<18x128xf32>
    %240 = arith.addf %226, %239 : vector<18x128xf32>
    %c4_111 = arith.constant 4 : index
    %c1_112 = arith.constant 1 : index
    %c0_113 = arith.constant 0 : index
    %241 = vector.load %arg5[%c4_111, %c1_112, %c0_113] : memref<9x20x128xf32, #tpu.memory_space<vmem>>, vector<1x18x128xf32>
    %242 = vector.shape_cast %241 : vector<1x18x128xf32> to vector<18x128xf32>
    %c31 = arith.constant 31 : index
    %243 = memref.load %arg1[%c31] : memref<81xf32, #tpu.memory_space<smem>>
    %244 = vector.broadcast %243 : f32 to vector<18x128xf32>
    %245 = arith.mulf %242, %244 : vector<18x128xf32>
    %246 = arith.addf %232, %245 : vector<18x128xf32>
    %c40 = arith.constant 40 : index
    %247 = memref.load %arg1[%c40] : memref<81xf32, #tpu.memory_space<smem>>
    %248 = vector.broadcast %247 : f32 to vector<18x128xf32>
    %249 = arith.mulf %242, %248 : vector<18x128xf32>
    %250 = arith.addf %236, %249 : vector<18x128xf32>
    %c49 = arith.constant 49 : index
    %251 = memref.load %arg1[%c49] : memref<81xf32, #tpu.memory_space<smem>>
    %252 = vector.broadcast %251 : f32 to vector<18x128xf32>
    %253 = arith.mulf %242, %252 : vector<18x128xf32>
    %254 = arith.addf %240, %253 : vector<18x128xf32>
    %c7_114 = arith.constant 7 : index
    %c1_115 = arith.constant 1 : index
    %c0_116 = arith.constant 0 : index
    %255 = vector.load %arg5[%c7_114, %c1_115, %c0_116] : memref<9x20x128xf32, #tpu.memory_space<vmem>>, vector<1x18x128xf32>
    %256 = vector.shape_cast %255 : vector<1x18x128xf32> to vector<18x128xf32>
    %c32 = arith.constant 32 : index
    %257 = memref.load %arg1[%c32] : memref<81xf32, #tpu.memory_space<smem>>
    %258 = vector.broadcast %257 : f32 to vector<18x128xf32>
    %259 = arith.mulf %256, %258 : vector<18x128xf32>
    %260 = arith.addf %246, %259 : vector<18x128xf32>
    %c41 = arith.constant 41 : index
    %261 = memref.load %arg1[%c41] : memref<81xf32, #tpu.memory_space<smem>>
    %262 = vector.broadcast %261 : f32 to vector<18x128xf32>
    %263 = arith.mulf %256, %262 : vector<18x128xf32>
    %264 = arith.addf %250, %263 : vector<18x128xf32>
    %c50 = arith.constant 50 : index
    %265 = memref.load %arg1[%c50] : memref<81xf32, #tpu.memory_space<smem>>
    %266 = vector.broadcast %265 : f32 to vector<18x128xf32>
    %267 = arith.mulf %256, %266 : vector<18x128xf32>
    %268 = arith.addf %254, %267 : vector<18x128xf32>
    %c1_117 = arith.constant 1 : index
    %c2_118 = arith.constant 2 : index
    %c0_119 = arith.constant 0 : index
    %269 = vector.load %arg5[%c1_117, %c2_118, %c0_119] : memref<9x20x128xf32, #tpu.memory_space<vmem>>, vector<1x18x128xf32>
    %270 = vector.shape_cast %269 : vector<1x18x128xf32> to vector<18x128xf32>
    %c33 = arith.constant 33 : index
    %271 = memref.load %arg1[%c33] : memref<81xf32, #tpu.memory_space<smem>>
    %272 = vector.broadcast %271 : f32 to vector<18x128xf32>
    %273 = arith.mulf %270, %272 : vector<18x128xf32>
    %274 = arith.addf %260, %273 : vector<18x128xf32>
    %c42 = arith.constant 42 : index
    %275 = memref.load %arg1[%c42] : memref<81xf32, #tpu.memory_space<smem>>
    %276 = vector.broadcast %275 : f32 to vector<18x128xf32>
    %277 = arith.mulf %270, %276 : vector<18x128xf32>
    %278 = arith.addf %264, %277 : vector<18x128xf32>
    %c51 = arith.constant 51 : index
    %279 = memref.load %arg1[%c51] : memref<81xf32, #tpu.memory_space<smem>>
    %280 = vector.broadcast %279 : f32 to vector<18x128xf32>
    %281 = arith.mulf %270, %280 : vector<18x128xf32>
    %282 = arith.addf %268, %281 : vector<18x128xf32>
    %c4_120 = arith.constant 4 : index
    %c2_121 = arith.constant 2 : index
    %c0_122 = arith.constant 0 : index
    %283 = vector.load %arg5[%c4_120, %c2_121, %c0_122] : memref<9x20x128xf32, #tpu.memory_space<vmem>>, vector<1x18x128xf32>
    %284 = vector.shape_cast %283 : vector<1x18x128xf32> to vector<18x128xf32>
    %c34 = arith.constant 34 : index
    %285 = memref.load %arg1[%c34] : memref<81xf32, #tpu.memory_space<smem>>
    %286 = vector.broadcast %285 : f32 to vector<18x128xf32>
    %287 = arith.mulf %284, %286 : vector<18x128xf32>
    %288 = arith.addf %274, %287 : vector<18x128xf32>
    %c43 = arith.constant 43 : index
    %289 = memref.load %arg1[%c43] : memref<81xf32, #tpu.memory_space<smem>>
    %290 = vector.broadcast %289 : f32 to vector<18x128xf32>
    %291 = arith.mulf %284, %290 : vector<18x128xf32>
    %292 = arith.addf %278, %291 : vector<18x128xf32>
    %c52 = arith.constant 52 : index
    %293 = memref.load %arg1[%c52] : memref<81xf32, #tpu.memory_space<smem>>
    %294 = vector.broadcast %293 : f32 to vector<18x128xf32>
    %295 = arith.mulf %284, %294 : vector<18x128xf32>
    %296 = arith.addf %282, %295 : vector<18x128xf32>
    %c7_123 = arith.constant 7 : index
    %c2_124 = arith.constant 2 : index
    %c0_125 = arith.constant 0 : index
    %297 = vector.load %arg5[%c7_123, %c2_124, %c0_125] : memref<9x20x128xf32, #tpu.memory_space<vmem>>, vector<1x18x128xf32>
    %298 = vector.shape_cast %297 : vector<1x18x128xf32> to vector<18x128xf32>
    %c35 = arith.constant 35 : index
    %299 = memref.load %arg1[%c35] : memref<81xf32, #tpu.memory_space<smem>>
    %300 = vector.broadcast %299 : f32 to vector<18x128xf32>
    %301 = arith.mulf %298, %300 : vector<18x128xf32>
    %302 = arith.addf %288, %301 : vector<18x128xf32>
    %c44 = arith.constant 44 : index
    %303 = memref.load %arg1[%c44] : memref<81xf32, #tpu.memory_space<smem>>
    %304 = vector.broadcast %303 : f32 to vector<18x128xf32>
    %305 = arith.mulf %298, %304 : vector<18x128xf32>
    %306 = arith.addf %292, %305 : vector<18x128xf32>
    %c53 = arith.constant 53 : index
    %307 = memref.load %arg1[%c53] : memref<81xf32, #tpu.memory_space<smem>>
    %308 = vector.broadcast %307 : f32 to vector<18x128xf32>
    %309 = arith.mulf %298, %308 : vector<18x128xf32>
    %310 = arith.addf %296, %309 : vector<18x128xf32>
    %c2_126 = arith.constant 2 : index
    %c0_127 = arith.constant 0 : index
    %c0_128 = arith.constant 0 : index
    %311 = vector.load %arg5[%c2_126, %c0_127, %c0_128] : memref<9x20x128xf32, #tpu.memory_space<vmem>>, vector<1x18x128xf32>
    %312 = vector.shape_cast %311 : vector<1x18x128xf32> to vector<18x128xf32>
    %c54 = arith.constant 54 : index
    %313 = memref.load %arg1[%c54] : memref<81xf32, #tpu.memory_space<smem>>
    %314 = vector.broadcast %313 : f32 to vector<18x128xf32>
    %315 = arith.mulf %312, %314 : vector<18x128xf32>
    %316 = arith.addf %302, %315 : vector<18x128xf32>
    %c63 = arith.constant 63 : index
    %317 = memref.load %arg1[%c63] : memref<81xf32, #tpu.memory_space<smem>>
    %318 = vector.broadcast %317 : f32 to vector<18x128xf32>
    %319 = arith.mulf %312, %318 : vector<18x128xf32>
    %320 = arith.addf %306, %319 : vector<18x128xf32>
    %c72 = arith.constant 72 : index
    %321 = memref.load %arg1[%c72] : memref<81xf32, #tpu.memory_space<smem>>
    %322 = vector.broadcast %321 : f32 to vector<18x128xf32>
    %323 = arith.mulf %312, %322 : vector<18x128xf32>
    %324 = arith.addf %310, %323 : vector<18x128xf32>
    %c5_129 = arith.constant 5 : index
    %c0_130 = arith.constant 0 : index
    %c0_131 = arith.constant 0 : index
    %325 = vector.load %arg5[%c5_129, %c0_130, %c0_131] : memref<9x20x128xf32, #tpu.memory_space<vmem>>, vector<1x18x128xf32>
    %326 = vector.shape_cast %325 : vector<1x18x128xf32> to vector<18x128xf32>
    %c55 = arith.constant 55 : index
    %327 = memref.load %arg1[%c55] : memref<81xf32, #tpu.memory_space<smem>>
    %328 = vector.broadcast %327 : f32 to vector<18x128xf32>
    %329 = arith.mulf %326, %328 : vector<18x128xf32>
    %330 = arith.addf %316, %329 : vector<18x128xf32>
    %c64 = arith.constant 64 : index
    %331 = memref.load %arg1[%c64] : memref<81xf32, #tpu.memory_space<smem>>
    %332 = vector.broadcast %331 : f32 to vector<18x128xf32>
    %333 = arith.mulf %326, %332 : vector<18x128xf32>
    %334 = arith.addf %320, %333 : vector<18x128xf32>
    %c73 = arith.constant 73 : index
    %335 = memref.load %arg1[%c73] : memref<81xf32, #tpu.memory_space<smem>>
    %336 = vector.broadcast %335 : f32 to vector<18x128xf32>
    %337 = arith.mulf %326, %336 : vector<18x128xf32>
    %338 = arith.addf %324, %337 : vector<18x128xf32>
    %c8_132 = arith.constant 8 : index
    %c0_133 = arith.constant 0 : index
    %c0_134 = arith.constant 0 : index
    %339 = vector.load %arg5[%c8_132, %c0_133, %c0_134] : memref<9x20x128xf32, #tpu.memory_space<vmem>>, vector<1x18x128xf32>
    %340 = vector.shape_cast %339 : vector<1x18x128xf32> to vector<18x128xf32>
    %c56 = arith.constant 56 : index
    %341 = memref.load %arg1[%c56] : memref<81xf32, #tpu.memory_space<smem>>
    %342 = vector.broadcast %341 : f32 to vector<18x128xf32>
    %343 = arith.mulf %340, %342 : vector<18x128xf32>
    %344 = arith.addf %330, %343 : vector<18x128xf32>
    %c65 = arith.constant 65 : index
    %345 = memref.load %arg1[%c65] : memref<81xf32, #tpu.memory_space<smem>>
    %346 = vector.broadcast %345 : f32 to vector<18x128xf32>
    %347 = arith.mulf %340, %346 : vector<18x128xf32>
    %348 = arith.addf %334, %347 : vector<18x128xf32>
    %c74 = arith.constant 74 : index
    %349 = memref.load %arg1[%c74] : memref<81xf32, #tpu.memory_space<smem>>
    %350 = vector.broadcast %349 : f32 to vector<18x128xf32>
    %351 = arith.mulf %340, %350 : vector<18x128xf32>
    %352 = arith.addf %338, %351 : vector<18x128xf32>
    %c2_135 = arith.constant 2 : index
    %c1_136 = arith.constant 1 : index
    %c0_137 = arith.constant 0 : index
    %353 = vector.load %arg5[%c2_135, %c1_136, %c0_137] : memref<9x20x128xf32, #tpu.memory_space<vmem>>, vector<1x18x128xf32>
    %354 = vector.shape_cast %353 : vector<1x18x128xf32> to vector<18x128xf32>
    %c57 = arith.constant 57 : index
    %355 = memref.load %arg1[%c57] : memref<81xf32, #tpu.memory_space<smem>>
    %356 = vector.broadcast %355 : f32 to vector<18x128xf32>
    %357 = arith.mulf %354, %356 : vector<18x128xf32>
    %358 = arith.addf %344, %357 : vector<18x128xf32>
    %c66 = arith.constant 66 : index
    %359 = memref.load %arg1[%c66] : memref<81xf32, #tpu.memory_space<smem>>
    %360 = vector.broadcast %359 : f32 to vector<18x128xf32>
    %361 = arith.mulf %354, %360 : vector<18x128xf32>
    %362 = arith.addf %348, %361 : vector<18x128xf32>
    %c75 = arith.constant 75 : index
    %363 = memref.load %arg1[%c75] : memref<81xf32, #tpu.memory_space<smem>>
    %364 = vector.broadcast %363 : f32 to vector<18x128xf32>
    %365 = arith.mulf %354, %364 : vector<18x128xf32>
    %366 = arith.addf %352, %365 : vector<18x128xf32>
    %c5_138 = arith.constant 5 : index
    %c1_139 = arith.constant 1 : index
    %c0_140 = arith.constant 0 : index
    %367 = vector.load %arg5[%c5_138, %c1_139, %c0_140] : memref<9x20x128xf32, #tpu.memory_space<vmem>>, vector<1x18x128xf32>
    %368 = vector.shape_cast %367 : vector<1x18x128xf32> to vector<18x128xf32>
    %c58 = arith.constant 58 : index
    %369 = memref.load %arg1[%c58] : memref<81xf32, #tpu.memory_space<smem>>
    %370 = vector.broadcast %369 : f32 to vector<18x128xf32>
    %371 = arith.mulf %368, %370 : vector<18x128xf32>
    %372 = arith.addf %358, %371 : vector<18x128xf32>
    %c67 = arith.constant 67 : index
    %373 = memref.load %arg1[%c67] : memref<81xf32, #tpu.memory_space<smem>>
    %374 = vector.broadcast %373 : f32 to vector<18x128xf32>
    %375 = arith.mulf %368, %374 : vector<18x128xf32>
    %376 = arith.addf %362, %375 : vector<18x128xf32>
    %c76 = arith.constant 76 : index
    %377 = memref.load %arg1[%c76] : memref<81xf32, #tpu.memory_space<smem>>
    %378 = vector.broadcast %377 : f32 to vector<18x128xf32>
    %379 = arith.mulf %368, %378 : vector<18x128xf32>
    %380 = arith.addf %366, %379 : vector<18x128xf32>
    %c8_141 = arith.constant 8 : index
    %c1_142 = arith.constant 1 : index
    %c0_143 = arith.constant 0 : index
    %381 = vector.load %arg5[%c8_141, %c1_142, %c0_143] : memref<9x20x128xf32, #tpu.memory_space<vmem>>, vector<1x18x128xf32>
    %382 = vector.shape_cast %381 : vector<1x18x128xf32> to vector<18x128xf32>
    %c59 = arith.constant 59 : index
    %383 = memref.load %arg1[%c59] : memref<81xf32, #tpu.memory_space<smem>>
    %384 = vector.broadcast %383 : f32 to vector<18x128xf32>
    %385 = arith.mulf %382, %384 : vector<18x128xf32>
    %386 = arith.addf %372, %385 : vector<18x128xf32>
    %c68 = arith.constant 68 : index
    %387 = memref.load %arg1[%c68] : memref<81xf32, #tpu.memory_space<smem>>
    %388 = vector.broadcast %387 : f32 to vector<18x128xf32>
    %389 = arith.mulf %382, %388 : vector<18x128xf32>
    %390 = arith.addf %376, %389 : vector<18x128xf32>
    %c77 = arith.constant 77 : index
    %391 = memref.load %arg1[%c77] : memref<81xf32, #tpu.memory_space<smem>>
    %392 = vector.broadcast %391 : f32 to vector<18x128xf32>
    %393 = arith.mulf %382, %392 : vector<18x128xf32>
    %394 = arith.addf %380, %393 : vector<18x128xf32>
    %c2_144 = arith.constant 2 : index
    %c2_145 = arith.constant 2 : index
    %c0_146 = arith.constant 0 : index
    %395 = vector.load %arg5[%c2_144, %c2_145, %c0_146] : memref<9x20x128xf32, #tpu.memory_space<vmem>>, vector<1x18x128xf32>
    %396 = vector.shape_cast %395 : vector<1x18x128xf32> to vector<18x128xf32>
    %c60 = arith.constant 60 : index
    %397 = memref.load %arg1[%c60] : memref<81xf32, #tpu.memory_space<smem>>
    %398 = vector.broadcast %397 : f32 to vector<18x128xf32>
    %399 = arith.mulf %396, %398 : vector<18x128xf32>
    %400 = arith.addf %386, %399 : vector<18x128xf32>
    %c69 = arith.constant 69 : index
    %401 = memref.load %arg1[%c69] : memref<81xf32, #tpu.memory_space<smem>>
    %402 = vector.broadcast %401 : f32 to vector<18x128xf32>
    %403 = arith.mulf %396, %402 : vector<18x128xf32>
    %404 = arith.addf %390, %403 : vector<18x128xf32>
    %c78 = arith.constant 78 : index
    %405 = memref.load %arg1[%c78] : memref<81xf32, #tpu.memory_space<smem>>
    %406 = vector.broadcast %405 : f32 to vector<18x128xf32>
    %407 = arith.mulf %396, %406 : vector<18x128xf32>
    %408 = arith.addf %394, %407 : vector<18x128xf32>
    %c5_147 = arith.constant 5 : index
    %c2_148 = arith.constant 2 : index
    %c0_149 = arith.constant 0 : index
    %409 = vector.load %arg5[%c5_147, %c2_148, %c0_149] : memref<9x20x128xf32, #tpu.memory_space<vmem>>, vector<1x18x128xf32>
    %410 = vector.shape_cast %409 : vector<1x18x128xf32> to vector<18x128xf32>
    %c61 = arith.constant 61 : index
    %411 = memref.load %arg1[%c61] : memref<81xf32, #tpu.memory_space<smem>>
    %412 = vector.broadcast %411 : f32 to vector<18x128xf32>
    %413 = arith.mulf %410, %412 : vector<18x128xf32>
    %414 = arith.addf %400, %413 : vector<18x128xf32>
    %c70 = arith.constant 70 : index
    %415 = memref.load %arg1[%c70] : memref<81xf32, #tpu.memory_space<smem>>
    %416 = vector.broadcast %415 : f32 to vector<18x128xf32>
    %417 = arith.mulf %410, %416 : vector<18x128xf32>
    %418 = arith.addf %404, %417 : vector<18x128xf32>
    %c79 = arith.constant 79 : index
    %419 = memref.load %arg1[%c79] : memref<81xf32, #tpu.memory_space<smem>>
    %420 = vector.broadcast %419 : f32 to vector<18x128xf32>
    %421 = arith.mulf %410, %420 : vector<18x128xf32>
    %422 = arith.addf %408, %421 : vector<18x128xf32>
    %c8_150 = arith.constant 8 : index
    %c2_151 = arith.constant 2 : index
    %c0_152 = arith.constant 0 : index
    %423 = vector.load %arg5[%c8_150, %c2_151, %c0_152] : memref<9x20x128xf32, #tpu.memory_space<vmem>>, vector<1x18x128xf32>
    %424 = vector.shape_cast %423 : vector<1x18x128xf32> to vector<18x128xf32>
    %c62 = arith.constant 62 : index
    %425 = memref.load %arg1[%c62] : memref<81xf32, #tpu.memory_space<smem>>
    %426 = vector.broadcast %425 : f32 to vector<18x128xf32>
    %427 = arith.mulf %424, %426 : vector<18x128xf32>
    %428 = arith.addf %414, %427 : vector<18x128xf32>
    %c71 = arith.constant 71 : index
    %429 = memref.load %arg1[%c71] : memref<81xf32, #tpu.memory_space<smem>>
    %430 = vector.broadcast %429 : f32 to vector<18x128xf32>
    %431 = arith.mulf %424, %430 : vector<18x128xf32>
    %432 = arith.addf %418, %431 : vector<18x128xf32>
    %c80 = arith.constant 80 : index
    %433 = memref.load %arg1[%c80] : memref<81xf32, #tpu.memory_space<smem>>
    %434 = vector.broadcast %433 : f32 to vector<18x128xf32>
    %435 = arith.mulf %424, %434 : vector<18x128xf32>
    %436 = arith.addf %422, %435 : vector<18x128xf32>
    %c0_153 = arith.constant 0 : index
    %c0_154 = arith.constant 0 : index
    %c0_155 = arith.constant 0 : index
    %c0_156 = arith.constant 0 : index
    %437 = vector.load %arg4[%c0_153, %c0_154, %c0_155, %c0_156] : memref<1x3x18x128xf32, #tpu.memory_space<vmem>>, vector<1x1x18x128xf32>
    %438 = vector.shape_cast %437 : vector<1x1x18x128xf32> to vector<18x128xf32>
    %439 = vector.shape_cast %428 : vector<18x128xf32> to vector<1x1x18x128xf32>
    tpu.vector_store %arg4[%c0_153, %c0_154, %c0_155, %c0_156], %439 {strides = array<i32>} : memref<1x3x18x128xf32, #tpu.memory_space<vmem>>, vector<1x1x18x128xf32>,
    %c0_157 = arith.constant 0 : index
    %c1_158 = arith.constant 1 : index
    %c0_159 = arith.constant 0 : index
    %c0_160 = arith.constant 0 : index
    %440 = vector.load %arg4[%c0_157, %c1_158, %c0_159, %c0_160] : memref<1x3x18x128xf32, #tpu.memory_space<vmem>>, vector<1x1x18x128xf32>
    %441 = vector.shape_cast %440 : vector<1x1x18x128xf32> to vector<18x128xf32>
    %442 = vector.shape_cast %432 : vector<18x128xf32> to vector<1x1x18x128xf32>
    tpu.vector_store %arg4[%c0_157, %c1_158, %c0_159, %c0_160], %442 {strides = array<i32>} : memref<1x3x18x128xf32, #tpu.memory_space<vmem>>, vector<1x1x18x128xf32>,
    %c0_161 = arith.constant 0 : index
    %c2_162 = arith.constant 2 : index
    %c0_163 = arith.constant 0 : index
    %c0_164 = arith.constant 0 : index
    %443 = vector.load %arg4[%c0_161, %c2_162, %c0_163, %c0_164] : memref<1x3x18x128xf32, #tpu.memory_space<vmem>>, vector<1x1x18x128xf32>
    %444 = vector.shape_cast %443 : vector<1x1x18x128xf32> to vector<18x128xf32>
    %445 = vector.shape_cast %436 : vector<18x128xf32> to vector<1x1x18x128xf32>
    tpu.vector_store %arg4[%c0_161, %c2_162, %c0_163, %c0_164], %445 {strides = array<i32>} : memref<1x3x18x128xf32, #tpu.memory_space<vmem>>, vector<1x1x18x128xf32>,
    return
  }
  func.func @transform_0(%arg0: i32) -> i32 {
    %c0_i32 = arith.constant 0 : i32
    %c0_i32_0 = arith.constant 0 : i32
    return %c0_i32 : i32
  }
  func.func @transform_1(%arg0: i32) -> i32 {
    %c0_i32 = arith.constant 0 : i32
    %c0_i32_0 = arith.constant 0 : i32
    return %c0_i32 : i32
  }
  func.func @transform_2(%arg0: i32) -> (i32, i32, i32, i32) {
    %c0_i32 = arith.constant 0 : i32
    %c0_i32_0 = arith.constant 0 : i32
    %c0_i32_1 = arith.constant 0 : i32
    %c0_i32_2 = arith.constant 0 : i32
    return %arg0, %c0_i32, %c0_i32_0, %c0_i32_1 : i32, i32, i32, i32
  }
  func.func @transform_3(%arg0: i32) -> (i32, i32, i32, i32) {
    %c0_i32 = arith.constant 0 : i32
    %c0_i32_0 = arith.constant 0 : i32
    %c0_i32_1 = arith.constant 0 : i32
    %c0_i32_2 = arith.constant 0 : i32
    return %arg0, %c0_i32, %c0_i32_0, %c0_i32_1 : i32, i32, i32, i32
  }
}

</mosaic_0001>

<llo_original>
// kernel: tpu_custom_call.1
$region0: #{tpu_custom_call.1}
  #allocation0 [shape = 'u32[]', space=smem, size = 0x4, offset = 0x4, fixed_abs, tag = 'smem constant byte address 0x4 - core index']
  #allocation1 [shape = 'u32[72,128]{1,0:T(1,128)}', space=vmem, size = 0x9000, scoped, tag = 'internal scratch']
  #allocation2 [shape = 'f32[9,20,128]{2,1,0:T(8,128)}', space=vmem, size = 0x1b000, scoped, tag = 'scratch operand']
  %s0 = inlined_call_operand.hbm [shape: f32[81], index: 0, kind: input, shape index: {}]
  %s1 = inlined_call_operand.hbm [shape: f32[3], index: 1, kind: input, shape index: {}]
  %s2 = inlined_call_operand.hbm [shape: f32[2,3,16,16], index: 2, kind: input, shape index: {}]
  %s3 = inlined_call_operand.vmem [shape: f32[2,3,18,128], index: 3, kind: output, shape index: {}]
  %s4 = sld [smem:[#allocation0]]
  $region57: #{tpu_custom_call.1} parent=0
    _
  %s6 = ssub.s32 1, %s4
  %s7 = scalar_select 0, %s6, %s4
  $region1: #{tpu_custom_call.1} parent=0
    #allocation3 [shape = 'u8[512]{0}', space=smem, size = 0x200, scoped, tag = 'input window, operand 0, single buffered']
    #allocation4 [shape = 's32[2]{0}', space=sflag, size = 0x8, scoped, tag = 'scoped memory for tpu_custom_call.1']
    #allocation5 [shape = 's32[2]{0}', space=sflag, size = 0x8, scoped, tag = 'scoped memory for tpu_custom_call.1']
    #allocation6 [shape = 'u8[512]{0}', space=smem, size = 0x200, scoped, tag = 'input window, operand 1, single buffered']
    #allocation7 [shape = 's32[1]{0}', space=sflag, size = 0x4, scoped, tag = 'scoped memory for tpu_custom_call.1']
    #allocation8 [shape = 'u8[49152]{0}', space=vmem, size = 0xc000, scoped, tag = 'input window, operand 2']
    %8 = vsyncpa [#allocation5], 0
    %9 = vsyncpa [#allocation7], 0
    %10 = vsyncpa [#allocation4], 0
    %s11 = scalar_lea.sflag [#allocation4], 1
    %12 = vsyncpa %s11, 0
    loop: start=0, step=1, limit=4
    $region2: #{tpu_custom_call.1} parent=1 // loop_pre_header
      _
    $region3: #{tpu_custom_call.1} parent=1 // loop_header
      %s14 = sphi 0, %s18
      %p15 = scmp.ge.s32.totalorder %s14, 4
      %s22 = sphi 0, %s22
      %s24 = sphi 0, %s22
      %s25 = sphi 0, %s24
      %s39 = sphi 0, %s25
      %s43 = sphi 0, %s43
      %s45 = sphi 0, %s43
      %s46 = sphi 0, %s45
      %s60 = sphi 0, %s46
      %s66 = sphi 0, %s68
      %s69 = sphi 0, %s66
      %s70 = sphi 0, %s69
      %s86 = sphi 0, %s70
      %s92 = sphi 0, %s94
      %s95 = sphi 0, %s92
      %s96 = sphi 0, %s95
      %s112 = sphi 0, %s96
    $region4: #{tpu_custom_call.1} parent=1 // loop_header_branch
      %17 = sbr.rel (%p15) target = $region8
    $region5: #{tpu_custom_call.1} parent=1 // loop_body
      %s19 = ssub.s32 %s14, 1
      %s20 = ssub.s32 %s14, 2
      %s21 = sadd.s32 %s14, 1
      %s23 = sadd.s32 %s22, 1
      %p26 = scmp.eq.s32.totalorder %s14, 1
      %p27 = scmp.ne.s32.totalorder %s22, %s24
      %p28 = scmp.eq.s32.totalorder %s14, 0
      %p29 = por %p27, %p28
      %p30 = scmp.ne.s32.totalorder %s22, %s24
      %p31 = scmp.eq.s32.totalorder %s19, 1
      %p32 = por %p30, %p31
      %p33 = scmp.ne.s32.totalorder %s24, %s25
      %p34 = scmp.eq.s32.totalorder %s19, 0
      %p35 = por %p33, %p34
      %p36 = scmp.ne.s32.totalorder %s24, %s25
      %p37 = scmp.eq.s32.totalorder %s20, 1
      %p38 = por %p36, %p37
      %p40 = scmp.ne.s32.totalorder %s25, %s39
      %p41 = scmp.eq.s32.totalorder %s20, 0
      %p42 = por %p40, %p41
      %s44 = sadd.s32 %s43, 1
      %p47 = scmp.eq.s32.totalorder %s14, 1
      %p48 = scmp.ne.s32.totalorder %s43, %s45
      %p49 = scmp.eq.s32.totalorder %s14, 0
      %p50 = por %p48, %p49
      %p51 = scmp.ne.s32.totalorder %s43, %s45
      %p52 = scmp.eq.s32.totalorder %s19, 1
      %p53 = por %p51, %p52
      %p54 = scmp.ne.s32.totalorder %s45, %s46
      %p55 = scmp.eq.s32.totalorder %s19, 0
      %p56 = por %p54, %p55
      %p57 = scmp.ne.s32.totalorder %s45, %s46
      %p58 = scmp.eq.s32.totalorder %s20, 1
      %p59 = por %p57, %p58
      %p61 = scmp.ne.s32.totalorder %s46, %s60
      %p62 = scmp.eq.s32.totalorder %s20, 0
      %p63 = por %p61, %p62
      %s64 = ssub.s32 %s14, %s21
      %p65 = scmp.eq.s32.totalorder %s64, 0
      %s67 = sadd.s32 %s66, 1
      %s68 = scalar_select %p65, %s66, %s67
      %p71 = pneg %p65
      %p72 = scmp.eq.s32.totalorder %s14, 1
      %p73 = por %p71, %p72
      %p74 = scmp.ne.s32.totalorder %s66, %s69
      %p75 = scmp.eq.s32.totalorder %s14, 0
      %p76 = por %p74, %p75
      %p77 = scmp.ne.s32.totalorder %s66, %s69
      %p78 = scmp.eq.s32.totalorder %s19, 1
      %p79 = por %p77, %p78
      %p80 = scmp.ne.s32.totalorder %s69, %s70
      %p81 = scmp.eq.s32.totalorder %s19, 0
      %p82 = por %p80, %p81
      %p83 = scmp.ne.s32.totalorder %s69, %s70
      %p84 = scmp.eq.s32.totalorder %s20, 1
      %p85 = por %p83, %p84
      %p87 = scmp.ne.s32.totalorder %s70, %s86
      %p88 = scmp.eq.s32.totalorder %s20, 0
      %p89 = por %p87, %p88
      %s90 = ssub.s32 %s14, %s21
      %p91 = scmp.eq.s32.totalorder %s90, 0
      %s93 = sadd.s32 %s92, 1
      %s94 = scalar_select %p91, %s92, %s93
      %p97 = pneg %p91
      %p98 = scmp.eq.s32.totalorder %s14, 1
      %p99 = por %p97, %p98
      %p100 = scmp.ne.s32.totalorder %s92, %s95
      %p101 = scmp.eq.s32.totalorder %s14, 0
      %p102 = por %p100, %p101
      %p103 = scmp.ne.s32.totalorder %s92, %s95
      %p104 = scmp.eq.s32.totalorder %s19, 1
      %p105 = por %p103, %p104
      %p106 = scmp.ne.s32.totalorder %s95, %s96
      %p107 = scmp.eq.s32.totalorder %s19, 0
      %p108 = por %p106, %p107
      %p109 = scmp.ne.s32.totalorder %s95, %s96
      %p110 = scmp.eq.s32.totalorder %s20, 1
      %p111 = por %p109, %p110
      %p113 = scmp.ne.s32.totalorder %s96, %s112
      %p114 = scmp.eq.s32.totalorder %s20, 0
      %p115 = por %p113, %p114
      %p116 = scmp.le.s32.totalorder 1, %s14
      %p117 = scmp.lt.s32.totalorder %s14, 3
      %p118 = pnand %p116, %p117
      %p119 = pneg %p118
      // Predicated region
      $region9: #{tpu_custom_call.1} parent=5 // pred_check
        _
      $region10: #{tpu_custom_call.1} parent=5 // pred_check_branch
        %121 = sbr.rel (%p118) target = $region12
      $region11: #{tpu_custom_call.1} parent=5 // pred_region
        %s122 = ssub.s32 %s14, 1
        // Predicated region
        $region13: #{tpu_custom_call.1} parent=11 // pred_check
          %p123 = pneg %p35
        $region14: #{tpu_custom_call.1} parent=11 // pred_check_branch
          %125 = sbr.rel (%p123) target = $region16
        $region15: #{tpu_custom_call.1} parent=11 // pred_region
          %127 = vsyncadd [#allocation5], 0
          %s129 = sshll.u32 %s0, 4
          %s130 = int_to_ptr.hbm [resolvable:$true] %s129
          %132 = dma.hbm_to_smem %s130, 16, [#allocation3], [#allocation5]
        $region16: #{tpu_custom_call.1} parent=11 // pred_fallthru
          _
        // Predicated region
        $region17: #{tpu_custom_call.1} parent=11 // pred_check
          %p133 = pneg %p56
        $region18: #{tpu_custom_call.1} parent=11 // pred_check_branch
          %135 = sbr.rel (%p133) target = $region20
        $region19: #{tpu_custom_call.1} parent=11 // pred_region
          %137 = vsyncadd [#allocation7], 0
          %s139 = sshll.u32 %s1, 4
          %s140 = int_to_ptr.hbm [resolvable:$true] %s139
          %142 = dma.hbm_to_smem %s140, 16, [#allocation6], [#allocation7]
        $region20: #{tpu_custom_call.1} parent=11 // pred_fallthru
          _
      $region12: #{tpu_custom_call.1} parent=5 // pred_fallthru
        _
      %p143 = scmp.lt.s32.totalorder %s14, 2
      // Predicated region
      $region21: #{tpu_custom_call.1} parent=5 // pred_check
        %p144 = pneg %p143
      $region22: #{tpu_custom_call.1} parent=5 // pred_check_branch
        %146 = sbr.rel (%p144) target = $region24
      $region23: #{tpu_custom_call.1} parent=5 // pred_region
        // Predicated region
        $region25: #{tpu_custom_call.1} parent=23 // pred_check
          %p147 = pneg %p76
        $region26: #{tpu_custom_call.1} parent=23 // pred_check_branch
          %149 = sbr.rel (%p147) target = $region28
        $region27: #{tpu_custom_call.1} parent=23 // pred_region
          %s150 = sand.u32 %s66, 1
          %s151 = scalar_lea.sflag [#allocation4], %s150
          %s152 = sand.u32 %s66, 1
          %s153 = smul.addr %s152, 48
          %s154 = scalar_lea.vmem [#allocation8], %s153
          %156 = vsyncadd %s151, 0
          %s157 = smul.addr %s14, 6
          %s158 = smul.addr %s157, 8
          %s159 = scalar_lea.hbm %s2, %s158
          %s160 = sshll.u32 %s159, 4
          %s161 = int_to_ptr.hbm [resolvable:$true] %s160
          %s162 = sshll.u32 %s154, 4
          %s163 = int_to_ptr.vmem [resolvable:$true] %s162
          %168 = dma.hbm_to_vmem [thread:$0]  %s161, 768, %s163, %s151, 128, 128, 8
        $region28: #{tpu_custom_call.1} parent=23 // pred_fallthru
          _
      $region24: #{tpu_custom_call.1} parent=5 // pred_fallthru
        _
      %p169 = scmp.le.s32.totalorder 1, %s14
      %p170 = scmp.lt.s32.totalorder %s14, 3
      %p171 = pnand %p169, %p170
      %p172 = pneg %p171
      // Predicated region
      $region29: #{tpu_custom_call.1} parent=5 // pred_check
        _
      $region30: #{tpu_custom_call.1} parent=5 // pred_check_branch
        %174 = sbr.rel (%p171) target = $region32
      $region31: #{tpu_custom_call.1} parent=5 // pred_region
        %s175 = ssub.s32 %s14, 1
        // Predicated region
        $region33: #{tpu_custom_call.1} parent=31 // pred_check
          %p176 = pneg %p35
        $region34: #{tpu_custom_call.1} parent=31 // pred_check_branch
          %178 = sbr.rel (%p176) target = $region36
        $region35: #{tpu_custom_call.1} parent=31 // pred_region
          %180 = dma.done [#allocation5], 16
        $region36: #{tpu_custom_call.1} parent=31 // pred_fallthru
          _
        // Predicated region
        $region37: #{tpu_custom_call.1} parent=31 // pred_check
          %p181 = pneg %p56
        $region38: #{tpu_custom_call.1} parent=31 // pred_check_branch
          %183 = sbr.rel (%p181) target = $region40
        $region39: #{tpu_custom_call.1} parent=31 // pred_region
          %185 = dma.done [#allocation7], 16
        $region40: #{tpu_custom_call.1} parent=31 // pred_fallthru
          _
        %s186 = sand.u32 %s69, 1
        %s187 = scalar_lea.sflag [#allocation4], %s186
        %s188 = sand.u32 %s69, 1
        %s189 = smul.addr %s188, 48
        %s190 = scalar_lea.vmem [#allocation8], %s189
        // Predicated region
        $region41: #{tpu_custom_call.1} parent=31 // pred_check
          %p191 = pneg %p82
        $region42: #{tpu_custom_call.1} parent=31 // pred_check_branch
          %193 = sbr.rel (%p191) target = $region44
        $region43: #{tpu_custom_call.1} parent=31 // pred_region
          %195 = dma.done %s187, 768
        $region44: #{tpu_custom_call.1} parent=31 // pred_fallthru
          _
        %196 = sfence
        %p197 = pneg %p35
        %p198 = pneg %p32
        %p199 = pneg %p56
        %p200 = pneg %p53
        %s201 = sand.u32 %s69, 1
        %s202 = scalar_lea.sflag [#allocation4], %s201
        %s203 = sand.u32 %s69, 1
        %s204 = smul.addr %s203, 48
        %s205 = scalar_lea.vmem [#allocation8], %s204
        %p206 = pneg %p82
        %p207 = pneg %p79
        %p208 = pneg %p108
        %p209 = pneg %p105
        %p210 = scmp.lt.s32.totalorder %s19, 1
        %s211 = scalar_select %p210, %s19, 1
        %s212 = smul.addr %s211, 9
        %s213 = smul.addr %s212, 8
        %s214 = scalar_lea.vmem %s3, %s213
        %p215 = scmp.lt.s32.totalorder %s19, 1
        %s216 = scalar_select %p215, %s19, 1
        %s217 = smul.addr %s216, 9
        %s218 = smul.addr %s217, 8
        %s219 = scalar_lea.vmem %s3, %s218
        %220 = vst [vmem:[#allocation2] sm:$0xff] 0.0
        %221 = vst [vmem:[#allocation2 + $0x8] sm:$0xff] 0.0
        %222 = vst [vmem:[#allocation2 + $0x10] sm:$0xf] 0.0
        %223 = vst [vmem:[#allocation2 + $0x18] sm:$0xff] 0.0
        %224 = vst [vmem:[#allocation2 + $0x20] sm:$0xff] 0.0
        %225 = vst [vmem:[#allocation2 + $0x28] sm:$0xf] 0.0
        %226 = vst [vmem:[#allocation2 + $0x30] sm:$0xff] 0.0
        %227 = vst [vmem:[#allocation2 + $0x38] sm:$0xff] 0.0
        %228 = vst [vmem:[#allocation2 + $0x40] sm:$0xf] 0.0
        %229 = vst [vmem:[#allocation2 + $0x48] sm:$0xff] 0.0
        %230 = vst [vmem:[#allocation2 + $0x50] sm:$0xff] 0.0
        %231 = vst [vmem:[#allocation2 + $0x58] sm:$0xf] 0.0
        %232 = vst [vmem:[#allocation2 + $0x60] sm:$0xff] 0.0
        %233 = vst [vmem:[#allocation2 + $0x68] sm:$0xff] 0.0
        %234 = vst [vmem:[#allocation2 + $0x70] sm:$0xf] 0.0
        %235 = vst [vmem:[#allocation2 + $0x78] sm:$0xff] 0.0
        %236 = vst [vmem:[#allocation2 + $0x80] sm:$0xff] 0.0
        %237 = vst [vmem:[#allocation2 + $0x88] sm:$0xf] 0.0
        %238 = vst [vmem:[#allocation2 + $0x90] sm:$0xff] 0.0
        %239 = vst [vmem:[#allocation2 + $0x98] sm:$0xff] 0.0
        %240 = vst [vmem:[#allocation2 + $0xa0] sm:$0xf] 0.0
        %241 = vst [vmem:[#allocation2 + $0xa8] sm:$0xff] 0.0
        %242 = vst [vmem:[#allocation2 + $0xb0] sm:$0xff] 0.0
        %243 = vst [vmem:[#allocation2 + $0xb8] sm:$0xf] 0.0
        %244 = vst [vmem:[#allocation2 + $0xc0] sm:$0xff] 0.0
        %245 = vst [vmem:[#allocation2 + $0xc8] sm:$0xff] 0.0
        %246 = vst [vmem:[#allocation2 + $0xd0] sm:$0xf] 0.0
        %v247 = vld [vmem:[%s190] sm:$0xff]
        %v248 = vld [vmem:[%s190 + $0x8] sm:$0xff]
        %251 = vrot.lane.b32.xlu0 %v247, 2
        %v252 = vpop.permute.xlu0 %251
        %253 = vrot.lane.b32.xlu0 %v248, 2
        %v254 = vpop.permute.xlu0 %253
        %vm257 = vcmask 146448
        %258 = vst.msk [vmem:[#allocation2 + $0x2] sm:$0xff] %vm257, %v252
        %259 = vst.msk [vmem:[#allocation2 + $0xa] sm:$0xff] %vm257, %v254
        %s260 = scalar_lea.vmem %s190, 16 [#allocation8]
        %v261 = vld [vmem:[%s260] sm:$0xff]
        %v262 = vld [vmem:[%s260 + $0x8] sm:$0xff]
        %265 = vrot.lane.b32.xlu0 %v261, 2
        %v266 = vpop.permute.xlu0 %265
        %267 = vrot.lane.b32.xlu0 %v262, 2
        %v268 = vpop.permute.xlu0 %267
        %s271 = scalar_lea.vmem [#allocation2], 24
        %272 = vst.msk [vmem:[%s271 + $0x2] sm:$0xff] %vm257, %v266
        %273 = vst.msk [vmem:[%s271 + $0xa] sm:$0xff] %vm257, %v268
        %s274 = scalar_lea.vmem %s190, 32 [#allocation8]
        %v275 = vld [vmem:[%s274] sm:$0xff]
        %v276 = vld [vmem:[%s274 + $0x8] sm:$0xff]
        %279 = vrot.lane.b32.xlu0 %v275, 2
        %v280 = vpop.permute.xlu0 %279
        %281 = vrot.lane.b32.xlu0 %v276, 2
        %v282 = vpop.permute.xlu0 %281
        %s285 = scalar_lea.vmem [#allocation2], 48
        %286 = vst.msk [vmem:[%s285 + $0x2] sm:$0xff] %vm257, %v280
        %287 = vst.msk [vmem:[%s285 + $0xa] sm:$0xff] %vm257, %v282
        %v288 = vld [vmem:[%s190] sm:$0xff]
        %v289 = vld [vmem:[%s190 + $0x8] sm:$0xff]
        %292 = vrot.lane.b32.xlu0 %v288, 1
        %v293 = vpop.permute.xlu0 %292
        %294 = vrot.lane.b32.xlu0 %v289, 1
        %v295 = vpop.permute.xlu0 %294
        %s298 = scalar_lea.vmem [#allocation2], 72
        %vm299 = vcmask 138248
        %300 = vst.msk [vmem:[%s298 + $0x2] sm:$0xff] %vm299, %v293
        %301 = vst.msk [vmem:[%s298 + $0xa] sm:$0xff] %vm299, %v295
        %v302 = vld [vmem:[%s260] sm:$0xff]
        %v303 = vld [vmem:[%s260 + $0x8] sm:$0xff]
        %306 = vrot.lane.b32.xlu0 %v302, 1
        %v307 = vpop.permute.xlu0 %306
        %308 = vrot.lane.b32.xlu0 %v303, 1
        %v309 = vpop.permute.xlu0 %308
        %s312 = scalar_lea.vmem [#allocation2], 96
        %313 = vst.msk [vmem:[%s312 + $0x2] sm:$0xff] %vm299, %v307
        %314 = vst.msk [vmem:[%s312 + $0xa] sm:$0xff] %vm299, %v309
        %v315 = vld [vmem:[%s274] sm:$0xff]
        %v316 = vld [vmem:[%s274 + $0x8] sm:$0xff]
        %319 = vrot.lane.b32.xlu0 %v315, 1
        %v320 = vpop.permute.xlu0 %319
        %321 = vrot.lane.b32.xlu0 %v316, 1
        %v322 = vpop.permute.xlu0 %321
        %s325 = scalar_lea.vmem [#allocation2], 120
        %326 = vst.msk [vmem:[%s325 + $0x2] sm:$0xff] %vm299, %v320
        %327 = vst.msk [vmem:[%s325 + $0xa] sm:$0xff] %vm299, %v322
        %v328 = vld [vmem:[%s190] sm:$0xff]
        %v329 = vld [vmem:[%s190 + $0x8] sm:$0xff]
        %s330 = scalar_lea.vmem [#allocation2], 144
        %vm331 = vcmask 130048
        %332 = vst.msk [vmem:[%s330 + $0x2] sm:$0xff] %vm331, %v328
        %333 = vst.msk [vmem:[%s330 + $0xa] sm:$0xff] %vm331, %v329
        %v334 = vld [vmem:[%s260] sm:$0xff]
        %v335 = vld [vmem:[%s260 + $0x8] sm:$0xff]
        %s336 = scalar_lea.vmem [#allocation2], 168
        %337 = vst.msk [vmem:[%s336 + $0x2] sm:$0xff] %vm331, %v334
        %338 = vst.msk [vmem:[%s336 + $0xa] sm:$0xff] %vm331, %v335
        %v339 = vld [vmem:[%s274] sm:$0xff]
        %v340 = vld [vmem:[%s274 + $0x8] sm:$0xff]
        %s341 = scalar_lea.vmem [#allocation2], 192
        %342 = vst.msk [vmem:[%s341 + $0x2] sm:$0xff] %vm331, %v339
        %343 = vst.msk [vmem:[%s341 + $0xa] sm:$0xff] %vm331, %v340
        %s344 = sld [smem:[#allocation6]]
        %v345 = vstv %s344
        %v346 = vadd.f32 %v345, 0.0
        %s347 = sld [smem:[#allocation6 + $0x1]]
        %v348 = vstv %s347
        %v349 = vadd.f32 %v348, 0.0
        %s350 = sld [smem:[#allocation6 + $0x2]]
        %v351 = vstv %s350
        %v352 = vadd.f32 %v351, 0.0
        %v353 = vld [vmem:[#allocation2] sm:$0xff]
        %v354 = vld [vmem:[#allocation2 + $0x8] sm:$0xff]
        %v355 = vld [vmem:[#allocation2 + $0x10] sm:$0x3]
        %s356 = sld [smem:[#allocation3]]
        %v357 = vstv %s356
        %v358 = vmul.f32 %v353, %v357
        %v359 = vmul.f32 %v354, %v357
        %v360 = vmul.f32 %v355, %v357
        %v361 = vadd.f32 %v346, %v358
        %v362 = vadd.f32 %v346, %v359
        %v363 = vadd.f32 %v346, %v360
        %s364 = sld [smem:[#allocation3 + $0x9]]
        %v365 = vstv %s364
        %v366 = vmul.f32 %v353, %v365
        %v367 = vmul.f32 %v354, %v365
        %v368 = vmul.f32 %v355, %v365
        %v369 = vadd.f32 %v349, %v366
        %v370 = vadd.f32 %v349, %v367
        %v371 = vadd.f32 %v349, %v368
        %s372 = sld [smem:[#allocation3 + $0x12]]
        %v373 = vstv %s372
        %v374 = vmul.f32 %v353, %v373
        %v375 = vmul.f32 %v354, %v373
        %v376 = vmul.f32 %v355, %v373
        %v377 = vadd.f32 %v352, %v374
        %v378 = vadd.f32 %v352, %v375
        %v379 = vadd.f32 %v352, %v376
        %v380 = vld [vmem:[%s298] sm:$0xff]
        %v381 = vld [vmem:[%s298 + $0x8] sm:$0xff]
        %v382 = vld [vmem:[%s298 + $0x10] sm:$0x3]
        %s383 = sld [smem:[#allocation3 + $0x1]]
        %v384 = vstv %s383
        %v385 = vmul.f32 %v380, %v384
        %v386 = vmul.f32 %v381, %v384
        %v387 = vmul.f32 %v382, %v384
        %v388 = vadd.f32 %v361, %v385
        %v389 = vadd.f32 %v362, %v386
        %v390 = vadd.f32 %v363, %v387
        %s391 = sld [smem:[#allocation3 + $0xa]]
        %v392 = vstv %s391
        %v393 = vmul.f32 %v380, %v392
        %v394 = vmul.f32 %v381, %v392
        %v395 = vmul.f32 %v382, %v392
        %v396 = vadd.f32 %v369, %v393
        %v397 = vadd.f32 %v370, %v394
        %v398 = vadd.f32 %v371, %v395
        %s399 = sld [smem:[#allocation3 + $0x13]]
        %v400 = vstv %s399
        %v401 = vmul.f32 %v380, %v400
        %v402 = vmul.f32 %v381, %v400
        %v403 = vmul.f32 %v382, %v400
        %v404 = vadd.f32 %v377, %v401
        %v405 = vadd.f32 %v378, %v402
        %v406 = vadd.f32 %v379, %v403
        %v407 = vld [vmem:[%s330] sm:$0xff]
        %v408 = vld [vmem:[%s330 + $0x8] sm:$0xff]
        %v409 = vld [vmem:[%s330 + $0x10] sm:$0x3]
        %s410 = sld [smem:[#allocation3 + $0x2]]
        %v411 = vstv %s410
        %v412 = vmul.f32 %v407, %v411
        %v413 = vmul.f32 %v408, %v411
        %v414 = vmul.f32 %v409, %v411
        %v415 = vadd.f32 %v388, %v412
        %v416 = vadd.f32 %v389, %v413
        %v417 = vadd.f32 %v390, %v414
        %s418 = sld [smem:[#allocation3 + $0xb]]
        %v419 = vstv %s418
        %v420 = vmul.f32 %v407, %v419
        %v421 = vmul.f32 %v408, %v419
        %v422 = vmul.f32 %v409, %v419
        %v423 = vadd.f32 %v396, %v420
        %v424 = vadd.f32 %v397, %v421
        %v425 = vadd.f32 %v398, %v422
        %s426 = sld [smem:[#allocation3 + $0x14]]
        %v427 = vstv %s426
        %v428 = vmul.f32 %v407, %v427
        %v429 = vmul.f32 %v408, %v427
        %v430 = vmul.f32 %v409, %v427
        %v431 = vadd.f32 %v404, %v428
        %v432 = vadd.f32 %v405, %v429
        %v433 = vadd.f32 %v406, %v430
        %v434 = vld [vmem:[#allocation2 + $0x1] sm:$0xff]
        %v435 = vld [vmem:[#allocation2 + $0x9] sm:$0xff]
        %v436 = vld [vmem:[#allocation2 + $0x11] sm:$0x3]
        %s437 = sld [smem:[#allocation3 + $0x3]]
        %v438 = vstv %s437
        %v439 = vmul.f32 %v434, %v438
        %v440 = vmul.f32 %v435, %v438
        %v441 = vmul.f32 %v436, %v438
        %v442 = vadd.f32 %v415, %v439
        %v443 = vadd.f32 %v416, %v440
        %v444 = vadd.f32 %v417, %v441
        %s445 = sld [smem:[#allocation3 + $0xc]]
        %v446 = vstv %s445
        %v447 = vmul.f32 %v434, %v446
        %v448 = vmul.f32 %v435, %v446
        %v449 = vmul.f32 %v436, %v446
        %v450 = vadd.f32 %v423, %v447
        %v451 = vadd.f32 %v424, %v448
        %v452 = vadd.f32 %v425, %v449
        %s453 = sld [smem:[#allocation3 + $0x15]]
        %v454 = vstv %s453
        %v455 = vmul.f32 %v434, %v454
        %v456 = vmul.f32 %v435, %v454
        %v457 = vmul.f32 %v436, %v454
        %v458 = vadd.f32 %v431, %v455
        %v459 = vadd.f32 %v432, %v456
        %v460 = vadd.f32 %v433, %v457
        %v461 = vld [vmem:[%s298 + $0x1] sm:$0xff]
        %v462 = vld [vmem:[%s298 + $0x9] sm:$0xff]
        %v463 = vld [vmem:[%s298 + $0x11] sm:$0x3]
        %s464 = sld [smem:[#allocation3 + $0x4]]
        %v465 = vstv %s464
        %v466 = vmul.f32 %v461, %v465
        %v467 = vmul.f32 %v462, %v465
        %v468 = vmul.f32 %v463, %v465
        %v469 = vadd.f32 %v442, %v466
        %v470 = vadd.f32 %v443, %v467
        %v471 = vadd.f32 %v444, %v468
        %s472 = sld [smem:[#allocation3 + $0xd]]
        %v473 = vstv %s472
        %v474 = vmul.f32 %v461, %v473
        %v475 = vmul.f32 %v462, %v473
        %v476 = vmul.f32 %v463, %v473
        %v477 = vadd.f32 %v450, %v474
        %v478 = vadd.f32 %v451, %v475
        %v479 = vadd.f32 %v452, %v476
        %s480 = sld [smem:[#allocation3 + $0x16]]
        %v481 = vstv %s480
        %v482 = vmul.f32 %v461, %v481
        %v483 = vmul.f32 %v462, %v481
        %v484 = vmul.f32 %v463, %v481
        %v485 = vadd.f32 %v458, %v482
        %v486 = vadd.f32 %v459, %v483
        %v487 = vadd.f32 %v460, %v484
        %v488 = vld [vmem:[%s330 + $0x1] sm:$0xff]
        %v489 = vld [vmem:[%s330 + $0x9] sm:$0xff]
        %v490 = vld [vmem:[%s330 + $0x11] sm:$0x3]
        %s491 = sld [smem:[#allocation3 + $0x5]]
        %v492 = vstv %s491
        %v493 = vmul.f32 %v488, %v492
        %v494 = vmul.f32 %v489, %v492
        %v495 = vmul.f32 %v490, %v492
        %v496 = vadd.f32 %v469, %v493
        %v497 = vadd.f32 %v470, %v494
        %v498 = vadd.f32 %v471, %v495
        %s499 = sld [smem:[#allocation3 + $0xe]]
        %v500 = vstv %s499
        %v501 = vmul.f32 %v488, %v500
        %v502 = vmul.f32 %v489, %v500
        %v503 = vmul.f32 %v490, %v500
        %v504 = vadd.f32 %v477, %v501
        %v505 = vadd.f32 %v478, %v502
        %v506 = vadd.f32 %v479, %v503
        %s507 = sld [smem:[#allocation3 + $0x17]]
        %v508 = vstv %s507
        %v509 = vmul.f32 %v488, %v508
        %v510 = vmul.f32 %v489, %v508
        %v511 = vmul.f32 %v490, %v508
        %v512 = vadd.f32 %v485, %v509
        %v513 = vadd.f32 %v486, %v510
        %v514 = vadd.f32 %v487, %v511
        %v515 = vld [vmem:[#allocation2 + $0x2] sm:$0xff]
        %v516 = vld [vmem:[#allocation2 + $0xa] sm:$0xff]
        %v517 = vld [vmem:[#allocation2 + $0x12] sm:$0x3]
        %s518 = sld [smem:[#allocation3 + $0x6]]
        %v519 = vstv %s518
        %v520 = vmul.f32 %v515, %v519
        %v521 = vmul.f32 %v516, %v519
        %v522 = vmul.f32 %v517, %v519
        %v523 = vadd.f32 %v496, %v520
        %v524 = vadd.f32 %v497, %v521
        %v525 = vadd.f32 %v498, %v522
        %s526 = sld [smem:[#allocation3 + $0xf]]
        %v527 = vstv %s526
        %v528 = vmul.f32 %v515, %v527
        %v529 = vmul.f32 %v516, %v527
        %v530 = vmul.f32 %v517, %v527
        %v531 = vadd.f32 %v504, %v528
        %v532 = vadd.f32 %v505, %v529
        %v533 = vadd.f32 %v506, %v530
        %s534 = sld [smem:[#allocation3 + $0x18]]
        %v535 = vstv %s534
        %v536 = vmul.f32 %v515, %v535
        %v537 = vmul.f32 %v516, %v535
        %v538 = vmul.f32 %v517, %v535
        %v539 = vadd.f32 %v512, %v536
        %v540 = vadd.f32 %v513, %v537
        %v541 = vadd.f32 %v514, %v538
        %v542 = vld [vmem:[%s298 + $0x2] sm:$0xff]
        %v543 = vld [vmem:[%s298 + $0xa] sm:$0xff]
        %v544 = vld [vmem:[%s298 + $0x12] sm:$0x3]
        %s545 = sld [smem:[#allocation3 + $0x7]]
        %v546 = vstv %s545
        %v547 = vmul.f32 %v542, %v546
        %v548 = vmul.f32 %v543, %v546
        %v549 = vmul.f32 %v544, %v546
        %v550 = vadd.f32 %v523, %v547
        %v551 = vadd.f32 %v524, %v548
        %v552 = vadd.f32 %v525, %v549
        %s553 = sld [smem:[#allocation3 + $0x10]]
        %v554 = vstv %s553
        %v555 = vmul.f32 %v542, %v554
        %v556 = vmul.f32 %v543, %v554
        %v557 = vmul.f32 %v544, %v554
        %v558 = vadd.f32 %v531, %v555
        %v559 = vadd.f32 %v532, %v556
        %v560 = vadd.f32 %v533, %v557
        %s561 = sld [smem:[#allocation3 + $0x19]]
        %v562 = vstv %s561
        %v563 = vmul.f32 %v542, %v562
        %v564 = vmul.f32 %v543, %v562
        %v565 = vmul.f32 %v544, %v562
        %v566 = vadd.f32 %v539, %v563
        %v567 = vadd.f32 %v540, %v564
        %v568 = vadd.f32 %v541, %v565
        %v569 = vld [vmem:[%s330 + $0x2] sm:$0xff]
        %v570 = vld [vmem:[%s330 + $0xa] sm:$0xff]
        %v571 = vld [vmem:[%s330 + $0x12] sm:$0x3]
        %s572 = sld [smem:[#allocation3 + $0x8]]
        %v573 = vstv %s572
        %v574 = vmul.f32 %v569, %v573
        %v575 = vmul.f32 %v570, %v573
        %v576 = vmul.f32 %v571, %v573
        %v577 = vadd.f32 %v550, %v574
        %v578 = vadd.f32 %v551, %v575
        %v579 = vadd.f32 %v552, %v576
        %s580 = sld [smem:[#allocation3 + $0x11]]
        %v581 = vstv %s580
        %v582 = vmul.f32 %v569, %v581
        %v583 = vmul.f32 %v570, %v581
        %v584 = vmul.f32 %v571, %v581
        %v585 = vadd.f32 %v558, %v582
        %v586 = vadd.f32 %v559, %v583
        %v587 = vadd.f32 %v560, %v584
        %s588 = sld [smem:[#allocation3 + $0x1a]]
        %v589 = vstv %s588
        %v590 = vmul.f32 %v569, %v589
        %v591 = vmul.f32 %v570, %v589
        %v592 = vmul.f32 %v571, %v589
        %v593 = vadd.f32 %v566, %v590
        %v594 = vadd.f32 %v567, %v591
        %v595 = vadd.f32 %v568, %v592
        %v596 = vld [vmem:[%s271] sm:$0xff]
        %v597 = vld [vmem:[%s271 + $0x8] sm:$0xff]
        %v598 = vld [vmem:[%s271 + $0x10] sm:$0x3]
        %s599 = sld [smem:[#allocation3 + $0x1b]]
        %v600 = vstv %s599
        %v601 = vmul.f32 %v596, %v600
        %v602 = vmul.f32 %v597, %v600
        %v603 = vmul.f32 %v598, %v600
        %v604 = vadd.f32 %v577, %v601
        %v605 = vadd.f32 %v578, %v602
        %v606 = vadd.f32 %v579, %v603
        %s607 = sld [smem:[#allocation3 + $0x24]]
        %v608 = vstv %s607
        %v609 = vmul.f32 %v596, %v608
        %v610 = vmul.f32 %v597, %v608
        %v611 = vmul.f32 %v598, %v608
        %v612 = vadd.f32 %v585, %v609
        %v613 = vadd.f32 %v586, %v610
        %v614 = vadd.f32 %v587, %v611
        %s615 = sld [smem:[#allocation3 + $0x2d]]
        %v616 = vstv %s615
        %v617 = vmul.f32 %v596, %v616
        %v618 = vmul.f32 %v597, %v616
        %v619 = vmul.f32 %v598, %v616
        %v620 = vadd.f32 %v593, %v617
        %v621 = vadd.f32 %v594, %v618
        %v622 = vadd.f32 %v595, %v619
        %v623 = vld [vmem:[%s312] sm:$0xff]
        %v624 = vld [vmem:[%s312 + $0x8] sm:$0xff]
        %v625 = vld [vmem:[%s312 + $0x10] sm:$0x3]
        %s626 = sld [smem:[#allocation3 + $0x1c]]
        %v627 = vstv %s626
        %v628 = vmul.f32 %v623, %v627
        %v629 = vmul.f32 %v624, %v627
        %v630 = vmul.f32 %v625, %v627
        %v631 = vadd.f32 %v604, %v628
        %v632 = vadd.f32 %v605, %v629
        %v633 = vadd.f32 %v606, %v630
        %s634 = sld [smem:[#allocation3 + $0x25]]
        %v635 = vstv %s634
        %v636 = vmul.f32 %v623, %v635
        %v637 = vmul.f32 %v624, %v635
        %v638 = vmul.f32 %v625, %v635
        %v639 = vadd.f32 %v612, %v636
        %v640 = vadd.f32 %v613, %v637
        %v641 = vadd.f32 %v614, %v638
        %s642 = sld [smem:[#allocation3 + $0x2e]]
        %v643 = vstv %s642
        %v644 = vmul.f32 %v623, %v643
        %v645 = vmul.f32 %v624, %v643
        %v646 = vmul.f32 %v625, %v643
        %v647 = vadd.f32 %v620, %v644
        %v648 = vadd.f32 %v621, %v645
        %v649 = vadd.f32 %v622, %v646
        %v650 = vld [vmem:[%s336] sm:$0xff]
        %v651 = vld [vmem:[%s336 + $0x8] sm:$0xff]
        %v652 = vld [vmem:[%s336 + $0x10] sm:$0x3]
        %s653 = sld [smem:[#allocation3 + $0x1d]]
        %v654 = vstv %s653
        %v655 = vmul.f32 %v650, %v654
        %v656 = vmul.f32 %v651, %v654
        %v657 = vmul.f32 %v652, %v654
        %v658 = vadd.f32 %v631, %v655
        %v659 = vadd.f32 %v632, %v656
        %v660 = vadd.f32 %v633, %v657
        %s661 = sld [smem:[#allocation3 + $0x26]]
        %v662 = vstv %s661
        %v663 = vmul.f32 %v650, %v662
        %v664 = vmul.f32 %v651, %v662
        %v665 = vmul.f32 %v652, %v662
        %v666 = vadd.f32 %v639, %v663
        %v667 = vadd.f32 %v640, %v664
        %v668 = vadd.f32 %v641, %v665
        %s669 = sld [smem:[#allocation3 + $0x2f]]
        %v670 = vstv %s669
        %v671 = vmul.f32 %v650, %v670
        %v672 = vmul.f32 %v651, %v670
        %v673 = vmul.f32 %v652, %v670
        %v674 = vadd.f32 %v647, %v671
        %v675 = vadd.f32 %v648, %v672
        %v676 = vadd.f32 %v649, %v673
        %v677 = vld [vmem:[%s271 + $0x1] sm:$0xff]
        %v678 = vld [vmem:[%s271 + $0x9] sm:$0xff]
        %v679 = vld [vmem:[%s271 + $0x11] sm:$0x3]
        %s680 = sld [smem:[#allocation3 + $0x1e]]
        %v681 = vstv %s680
        %v682 = vmul.f32 %v677, %v681
        %v683 = vmul.f32 %v678, %v681
        %v684 = vmul.f32 %v679, %v681
        %v685 = vadd.f32 %v658, %v682
        %v686 = vadd.f32 %v659, %v683
        %v687 = vadd.f32 %v660, %v684
        %s688 = sld [smem:[#allocation3 + $0x27]]
        %v689 = vstv %s688
        %v690 = vmul.f32 %v677, %v689
        %v691 = vmul.f32 %v678, %v689
        %v692 = vmul.f32 %v679, %v689
        %v693 = vadd.f32 %v666, %v690
        %v694 = vadd.f32 %v667, %v691
        %v695 = vadd.f32 %v668, %v692
        %s696 = sld [smem:[#allocation3 + $0x30]]
        %v697 = vstv %s696
        %v698 = vmul.f32 %v677, %v697
        %v699 = vmul.f32 %v678, %v697
        %v700 = vmul.f32 %v679, %v697
        %v701 = vadd.f32 %v674, %v698
        %v702 = vadd.f32 %v675, %v699
        %v703 = vadd.f32 %v676, %v700
        %v704 = vld [vmem:[%s312 + $0x1] sm:$0xff]
        %v705 = vld [vmem:[%s312 + $0x9] sm:$0xff]
        %v706 = vld [vmem:[%s312 + $0x11] sm:$0x3]
        %s707 = sld [smem:[#allocation3 + $0x1f]]
        %v708 = vstv %s707
        %v709 = vmul.f32 %v704, %v708
        %v710 = vmul.f32 %v705, %v708
        %v711 = vmul.f32 %v706, %v708
        %v712 = vadd.f32 %v685, %v709
        %v713 = vadd.f32 %v686, %v710
        %v714 = vadd.f32 %v687, %v711
        %s715 = sld [smem:[#allocation3 + $0x28]]
        %v716 = vstv %s715
        %v717 = vmul.f32 %v704, %v716
        %v718 = vmul.f32 %v705, %v716
        %v719 = vmul.f32 %v706, %v716
        %v720 = vadd.f32 %v693, %v717
        %v721 = vadd.f32 %v694, %v718
        %v722 = vadd.f32 %v695, %v719
        %s723 = sld [smem:[#allocation3 + $0x31]]
        %v724 = vstv %s723
        %v725 = vmul.f32 %v704, %v724
        %v726 = vmul.f32 %v705, %v724
        %v727 = vmul.f32 %v706, %v724
        %v728 = vadd.f32 %v701, %v725
        %v729 = vadd.f32 %v702, %v726
        %v730 = vadd.f32 %v703, %v727
        %v731 = vld [vmem:[%s336 + $0x1] sm:$0xff]
        %v732 = vld [vmem:[%s336 + $0x9] sm:$0xff]
        %v733 = vld [vmem:[%s336 + $0x11] sm:$0x3]
        %s734 = sld [smem:[#allocation3 + $0x20]]
        %v735 = vstv %s734
        %v736 = vmul.f32 %v731, %v735
        %v737 = vmul.f32 %v732, %v735
        %v738 = vmul.f32 %v733, %v735
        %v739 = vadd.f32 %v712, %v736
        %v740 = vadd.f32 %v713, %v737
        %v741 = vadd.f32 %v714, %v738
        %s742 = sld [smem:[#allocation3 + $0x29]]
        %v743 = vstv %s742
        %v744 = vmul.f32 %v731, %v743
        %v745 = vmul.f32 %v732, %v743
        %v746 = vmul.f32 %v733, %v743
        %v747 = vadd.f32 %v720, %v744
        %v748 = vadd.f32 %v721, %v745
        %v749 = vadd.f32 %v722, %v746
        %s750 = sld [smem:[#allocation3 + $0x32]]
        %v751 = vstv %s750
        %v752 = vmul.f32 %v731, %v751
        %v753 = vmul.f32 %v732, %v751
        %v754 = vmul.f32 %v733, %v751
        %v755 = vadd.f32 %v728, %v752
        %v756 = vadd.f32 %v729, %v753
        %v757 = vadd.f32 %v730, %v754
        %v758 = vld [vmem:[%s271 + $0x2] sm:$0xff]
        %v759 = vld [vmem:[%s271 + $0xa] sm:$0xff]
        %v760 = vld [vmem:[%s271 + $0x12] sm:$0x3]
        %s761 = sld [smem:[#allocation3 + $0x21]]
        %v762 = vstv %s761
        %v763 = vmul.f32 %v758, %v762
        %v764 = vmul.f32 %v759, %v762
        %v765 = vmul.f32 %v760, %v762
        %v766 = vadd.f32 %v739, %v763
        %v767 = vadd.f32 %v740, %v764
        %v768 = vadd.f32 %v741, %v765
        %s769 = sld [smem:[#allocation3 + $0x2a]]
        %v770 = vstv %s769
        %v771 = vmul.f32 %v758, %v770
        %v772 = vmul.f32 %v759, %v770
        %v773 = vmul.f32 %v760, %v770
        %v774 = vadd.f32 %v747, %v771
        %v775 = vadd.f32 %v748, %v772
        %v776 = vadd.f32 %v749, %v773
        %s777 = sld [smem:[#allocation3 + $0x33]]
        %v778 = vstv %s777
        %v779 = vmul.f32 %v758, %v778
        %v780 = vmul.f32 %v759, %v778
        %v781 = vmul.f32 %v760, %v778
        %v782 = vadd.f32 %v755, %v779
        %v783 = vadd.f32 %v756, %v780
        %v784 = vadd.f32 %v757, %v781
        %v785 = vld [vmem:[%s312 + $0x2] sm:$0xff]
        %v786 = vld [vmem:[%s312 + $0xa] sm:$0xff]
        %v787 = vld [vmem:[%s312 + $0x12] sm:$0x3]
        %s788 = sld [smem:[#allocation3 + $0x22]]
        %v789 = vstv %s788
        %v790 = vmul.f32 %v785, %v789
        %v791 = vmul.f32 %v786, %v789
        %v792 = vmul.f32 %v787, %v789
        %v793 = vadd.f32 %v766, %v790
        %v794 = vadd.f32 %v767, %v791
        %v795 = vadd.f32 %v768, %v792
        %s796 = sld [smem:[#allocation3 + $0x2b]]
        %v797 = vstv %s796
        %v798 = vmul.f32 %v785, %v797
        %v799 = vmul.f32 %v786, %v797
        %v800 = vmul.f32 %v787, %v797
        %v801 = vadd.f32 %v774, %v798
        %v802 = vadd.f32 %v775, %v799
        %v803 = vadd.f32 %v776, %v800
        %s804 = sld [smem:[#allocation3 + $0x34]]
        %v805 = vstv %s804
        %v806 = vmul.f32 %v785, %v805
        %v807 = vmul.f32 %v786, %v805
        %v808 = vmul.f32 %v787, %v805
        %v809 = vadd.f32 %v782, %v806
        %v810 = vadd.f32 %v783, %v807
        %v811 = vadd.f32 %v784, %v808
        %v812 = vld [vmem:[%s336 + $0x2] sm:$0xff]
        %v813 = vld [vmem:[%s336 + $0xa] sm:$0xff]
        %v814 = vld [vmem:[%s336 + $0x12] sm:$0x3]
        %s815 = sld [smem:[#allocation3 + $0x23]]
        %v816 = vstv %s815
        %v817 = vmul.f32 %v812, %v816
        %v818 = vmul.f32 %v813, %v816
        %v819 = vmul.f32 %v814, %v816
        %v820 = vadd.f32 %v793, %v817
        %v821 = vadd.f32 %v794, %v818
        %v822 = vadd.f32 %v795, %v819
        %s823 = sld [smem:[#allocation3 + $0x2c]]
        %v824 = vstv %s823
        %v825 = vmul.f32 %v812, %v824
        %v826 = vmul.f32 %v813, %v824
        %v827 = vmul.f32 %v814, %v824
        %v828 = vadd.f32 %v801, %v825
        %v829 = vadd.f32 %v802, %v826
        %v830 = vadd.f32 %v803, %v827
        %s831 = sld [smem:[#allocation3 + $0x35]]
        %v832 = vstv %s831
        %v833 = vmul.f32 %v812, %v832
        %v834 = vmul.f32 %v813, %v832
        %v835 = vmul.f32 %v814, %v832
        %v836 = vadd.f32 %v809, %v833
        %v837 = vadd.f32 %v810, %v834
        %v838 = vadd.f32 %v811, %v835
        %v839 = vld [vmem:[%s285] sm:$0xff]
        %v840 = vld [vmem:[%s285 + $0x8] sm:$0xff]
        %v841 = vld [vmem:[%s285 + $0x10] sm:$0x3]
        %s842 = sld [smem:[#allocation3 + $0x36]]
        %v843 = vstv %s842
        %v844 = vmul.f32 %v839, %v843
        %v845 = vmul.f32 %v840, %v843
        %v846 = vmul.f32 %v841, %v843
        %v847 = vadd.f32 %v820, %v844
        %v848 = vadd.f32 %v821, %v845
        %v849 = vadd.f32 %v822, %v846
        %s850 = sld [smem:[#allocation3 + $0x3f]]
        %v851 = vstv %s850
        %v852 = vmul.f32 %v839, %v851
        %v853 = vmul.f32 %v840, %v851
        %v854 = vmul.f32 %v841, %v851
        %v855 = vadd.f32 %v828, %v852
        %v856 = vadd.f32 %v829, %v853
        %v857 = vadd.f32 %v830, %v854
        %s858 = sld [smem:[#allocation3 + $0x48]]
        %v859 = vstv %s858
        %v860 = vmul.f32 %v839, %v859
        %v861 = vmul.f32 %v840, %v859
        %v862 = vmul.f32 %v841, %v859
        %v863 = vadd.f32 %v836, %v860
        %v864 = vadd.f32 %v837, %v861
        %v865 = vadd.f32 %v838, %v862
        %v866 = vld [vmem:[%s325] sm:$0xff]
        %v867 = vld [vmem:[%s325 + $0x8] sm:$0xff]
        %v868 = vld [vmem:[%s325 + $0x10] sm:$0x3]
        %s869 = sld [smem:[#allocation3 + $0x37]]
        %v870 = vstv %s869
        %v871 = vmul.f32 %v866, %v870
        %v872 = vmul.f32 %v867, %v870
        %v873 = vmul.f32 %v868, %v870
        %v874 = vadd.f32 %v847, %v871
        %v875 = vadd.f32 %v848, %v872
        %v876 = vadd.f32 %v849, %v873
        %s877 = sld [smem:[#allocation3 + $0x40]]
        %v878 = vstv %s877
        %v879 = vmul.f32 %v866, %v878
        %v880 = vmul.f32 %v867, %v878
        %v881 = vmul.f32 %v868, %v878
        %v882 = vadd.f32 %v855, %v879
        %v883 = vadd.f32 %v856, %v880
        %v884 = vadd.f32 %v857, %v881
        %s885 = sld [smem:[#allocation3 + $0x49]]
        %v886 = vstv %s885
        %v887 = vmul.f32 %v866, %v886
        %v888 = vmul.f32 %v867, %v886
        %v889 = vmul.f32 %v868, %v886
        %v890 = vadd.f32 %v863, %v887
        %v891 = vadd.f32 %v864, %v888
        %v892 = vadd.f32 %v865, %v889
        %v893 = vld [vmem:[%s341] sm:$0xff]
        %v894 = vld [vmem:[%s341 + $0x8] sm:$0xff]
        %v895 = vld [vmem:[%s341 + $0x10] sm:$0x3]
        %s896 = sld [smem:[#allocation3 + $0x38]]
        %v897 = vstv %s896
        %v898 = vmul.f32 %v893, %v897
        %v899 = vmul.f32 %v894, %v897
        %v900 = vmul.f32 %v895, %v897
        %v901 = vadd.f32 %v874, %v898
        %v902 = vadd.f32 %v875, %v899
        %v903 = vadd.f32 %v876, %v900
        %s904 = sld [smem:[#allocation3 + $0x41]]
        %v905 = vstv %s904
        %v906 = vmul.f32 %v893, %v905
        %v907 = vmul.f32 %v894, %v905
        %v908 = vmul.f32 %v895, %v905
        %v909 = vadd.f32 %v882, %v906
        %v910 = vadd.f32 %v883, %v907
        %v911 = vadd.f32 %v884, %v908
        %s912 = sld [smem:[#allocation3 + $0x4a]]
        %v913 = vstv %s912
        %v914 = vmul.f32 %v893, %v913
        %v915 = vmul.f32 %v894, %v913
        %v916 = vmul.f32 %v895, %v913
        %v917 = vadd.f32 %v890, %v914
        %v918 = vadd.f32 %v891, %v915
        %v919 = vadd.f32 %v892, %v916
        %v920 = vld [vmem:[%s285 + $0x1] sm:$0xff]
        %v921 = vld [vmem:[%s285 + $0x9] sm:$0xff]
        %v922 = vld [vmem:[%s285 + $0x11] sm:$0x3]
        %s923 = sld [smem:[#allocation3 + $0x39]]
        %v924 = vstv %s923
        %v925 = vmul.f32 %v920, %v924
        %v926 = vmul.f32 %v921, %v924
        %v927 = vmul.f32 %v922, %v924
        %v928 = vadd.f32 %v901, %v925
        %v929 = vadd.f32 %v902, %v926
        %v930 = vadd.f32 %v903, %v927
        %s931 = sld [smem:[#allocation3 + $0x42]]
        %v932 = vstv %s931
        %v933 = vmul.f32 %v920, %v932
        %v934 = vmul.f32 %v921, %v932
        %v935 = vmul.f32 %v922, %v932
        %v936 = vadd.f32 %v909, %v933
        %v937 = vadd.f32 %v910, %v934
        %v938 = vadd.f32 %v911, %v935
        %s939 = sld [smem:[#allocation3 + $0x4b]]
        %v940 = vstv %s939
        %v941 = vmul.f32 %v920, %v940
        %v942 = vmul.f32 %v921, %v940
        %v943 = vmul.f32 %v922, %v940
        %v944 = vadd.f32 %v917, %v941
        %v945 = vadd.f32 %v918, %v942
        %v946 = vadd.f32 %v919, %v943
        %v947 = vld [vmem:[%s325 + $0x1] sm:$0xff]
        %v948 = vld [vmem:[%s325 + $0x9] sm:$0xff]
        %v949 = vld [vmem:[%s325 + $0x11] sm:$0x3]
        %s950 = sld [smem:[#allocation3 + $0x3a]]
        %v951 = vstv %s950
        %v952 = vmul.f32 %v947, %v951
        %v953 = vmul.f32 %v948, %v951
        %v954 = vmul.f32 %v949, %v951
        %v955 = vadd.f32 %v928, %v952
        %v956 = vadd.f32 %v929, %v953
        %v957 = vadd.f32 %v930, %v954
        %s958 = sld [smem:[#allocation3 + $0x43]]
        %v959 = vstv %s958
        %v960 = vmul.f32 %v947, %v959
        %v961 = vmul.f32 %v948, %v959
        %v962 = vmul.f32 %v949, %v959
        %v963 = vadd.f32 %v936, %v960
        %v964 = vadd.f32 %v937, %v961
        %v965 = vadd.f32 %v938, %v962
        %s966 = sld [smem:[#allocation3 + $0x4c]]
        %v967 = vstv %s966
        %v968 = vmul.f32 %v947, %v967
        %v969 = vmul.f32 %v948, %v967
        %v970 = vmul.f32 %v949, %v967
        %v971 = vadd.f32 %v944, %v968
        %v972 = vadd.f32 %v945, %v969
        %v973 = vadd.f32 %v946, %v970
        %v974 = vld [vmem:[%s341 + $0x1] sm:$0xff]
        %v975 = vld [vmem:[%s341 + $0x9] sm:$0xff]
        %v976 = vld [vmem:[%s341 + $0x11] sm:$0x3]
        %s977 = sld [smem:[#allocation3 + $0x3b]]
        %v978 = vstv %s977
        %v979 = vmul.f32 %v974, %v978
        %v980 = vmul.f32 %v975, %v978
        %v981 = vmul.f32 %v976, %v978
        %v982 = vadd.f32 %v955, %v979
        %v983 = vadd.f32 %v956, %v980
        %v984 = vadd.f32 %v957, %v981
        %s985 = sld [smem:[#allocation3 + $0x44]]
        %v986 = vstv %s985
        %v987 = vmul.f32 %v974, %v986
        %v988 = vmul.f32 %v975, %v986
        %v989 = vmul.f32 %v976, %v986
        %v990 = vadd.f32 %v963, %v987
        %v991 = vadd.f32 %v964, %v988
        %v992 = vadd.f32 %v965, %v989
        %s993 = sld [smem:[#allocation3 + $0x4d]]
        %v994 = vstv %s993
        %v995 = vmul.f32 %v974, %v994
        %v996 = vmul.f32 %v975, %v994
        %v997 = vmul.f32 %v976, %v994
        %v998 = vadd.f32 %v971, %v995
        %v999 = vadd.f32 %v972, %v996
        %v1000 = vadd.f32 %v973, %v997
        %v1001 = vld [vmem:[%s285 + $0x2] sm:$0xff]
        %v1002 = vld [vmem:[%s285 + $0xa] sm:$0xff]
        %v1003 = vld [vmem:[%s285 + $0x12] sm:$0x3]
        %s1004 = sld [smem:[#allocation3 + $0x3c]]
        %v1005 = vstv %s1004
        %v1006 = vmul.f32 %v1001, %v1005
        %v1007 = vmul.f32 %v1002, %v1005
        %v1008 = vmul.f32 %v1003, %v1005
        %v1009 = vadd.f32 %v982, %v1006
        %v1010 = vadd.f32 %v983, %v1007
        %v1011 = vadd.f32 %v984, %v1008
        %s1012 = sld [smem:[#allocation3 + $0x45]]
        %v1013 = vstv %s1012
        %v1014 = vmul.f32 %v1001, %v1013
        %v1015 = vmul.f32 %v1002, %v1013
        %v1016 = vmul.f32 %v1003, %v1013
        %v1017 = vadd.f32 %v990, %v1014
        %v1018 = vadd.f32 %v991, %v1015
        %v1019 = vadd.f32 %v992, %v1016
        %s1020 = sld [smem:[#allocation3 + $0x4e]]
        %v1021 = vstv %s1020
        %v1022 = vmul.f32 %v1001, %v1021
        %v1023 = vmul.f32 %v1002, %v1021
        %v1024 = vmul.f32 %v1003, %v1021
        %v1025 = vadd.f32 %v998, %v1022
        %v1026 = vadd.f32 %v999, %v1023
        %v1027 = vadd.f32 %v1000, %v1024
        %v1028 = vld [vmem:[%s325 + $0x2] sm:$0xff]
        %v1029 = vld [vmem:[%s325 + $0xa] sm:$0xff]
        %v1030 = vld [vmem:[%s325 + $0x12] sm:$0x3]
        %s1031 = sld [smem:[#allocation3 + $0x3d]]
        %v1032 = vstv %s1031
        %v1033 = vmul.f32 %v1028, %v1032
        %v1034 = vmul.f32 %v1029, %v1032
        %v1035 = vmul.f32 %v1030, %v1032
        %v1036 = vadd.f32 %v1009, %v1033
        %v1037 = vadd.f32 %v1010, %v1034
        %v1038 = vadd.f32 %v1011, %v1035
        %s1039 = sld [smem:[#allocation3 + $0x46]]
        %v1040 = vstv %s1039
        %v1041 = vmul.f32 %v1028, %v1040
        %v1042 = vmul.f32 %v1029, %v1040
        %v1043 = vmul.f32 %v1030, %v1040
        %v1044 = vadd.f32 %v1017, %v1041
        %v1045 = vadd.f32 %v1018, %v1042
        %v1046 = vadd.f32 %v1019, %v1043
        %s1047 = sld [smem:[#allocation3 + $0x4f]]
        %v1048 = vstv %s1047
        %v1049 = vmul.f32 %v1028, %v1048
        %v1050 = vmul.f32 %v1029, %v1048
        %v1051 = vmul.f32 %v1030, %v1048
        %v1052 = vadd.f32 %v1025, %v1049
        %v1053 = vadd.f32 %v1026, %v1050
        %v1054 = vadd.f32 %v1027, %v1051
        %v1055 = vld [vmem:[%s341 + $0x2] sm:$0xff]
        %v1056 = vld [vmem:[%s341 + $0xa] sm:$0xff]
        %v1057 = vld [vmem:[%s341 + $0x12] sm:$0x3]
        %s1058 = sld [smem:[#allocation3 + $0x3e]]
        %v1059 = vstv %s1058
        %v1060 = vmul.f32 %v1055, %v1059
        %v1061 = vmul.f32 %v1056, %v1059
        %v1062 = vmul.f32 %v1057, %v1059
        %v1063 = vadd.f32 %v1036, %v1060
        %v1064 = vadd.f32 %v1037, %v1061
        %v1065 = vadd.f32 %v1038, %v1062
        %s1066 = sld [smem:[#allocation3 + $0x47]]
        %v1067 = vstv %s1066
        %v1068 = vmul.f32 %v1055, %v1067
        %v1069 = vmul.f32 %v1056, %v1067
        %v1070 = vmul.f32 %v1057, %v1067
        %v1071 = vadd.f32 %v1044, %v1068
        %v1072 = vadd.f32 %v1045, %v1069
        %v1073 = vadd.f32 %v1046, %v1070
        %s1074 = sld [smem:[#allocation3 + $0x50]]
        %v1075 = vstv %s1074
        %v1076 = vmul.f32 %v1055, %v1075
        %v1077 = vmul.f32 %v1056, %v1075
        %v1078 = vmul.f32 %v1057, %v1075
        %v1079 = vadd.f32 %v1052, %v1076
        %v1080 = vadd.f32 %v1053, %v1077
        %v1081 = vadd.f32 %v1054, %v1078
        %1082 = vst [vmem:[%s219] sm:$0xff] %v1063
        %1083 = vst [vmem:[%s219 + $0x8] sm:$0xff] %v1064
        %1084 = vst [vmem:[%s219 + $0x10] sm:$0x3] %v1065
        %s1085 = scalar_lea.vmem %s219, 24
        %1086 = vst [vmem:[%s1085] sm:$0xff] %v1071
        %1087 = vst [vmem:[%s1085 + $0x8] sm:$0xff] %v1072
        %1088 = vst [vmem:[%s1085 + $0x10] sm:$0x3] %v1073
        %s1089 = scalar_lea.vmem %s219, 48
        %1090 = vst [vmem:[%s1089] sm:$0xff] %v1079
        %1091 = vst [vmem:[%s1089 + $0x8] sm:$0xff] %v1080
        %1092 = vst [vmem:[%s1089 + $0x10] sm:$0x3] %v1081
        %p1093 = scmp.lt.s32.totalorder %s19, 1
        %s1094 = scalar_select %p1093, %s19, 1
        %s1095 = smul.addr %s1094, 9
        %s1096 = smul.addr %s1095, 8
        %s1097 = scalar_lea.vmem %s3, %s1096
        // Predicated region
        $region45: #{tpu_custom_call.1} parent=31 // pred_check
          %p1098 = pneg %p105
        $region46: #{tpu_custom_call.1} parent=31 // pred_check_branch
          %1100 = sbr.rel (%p1098) target = $region48
        $region47: #{tpu_custom_call.1} parent=31 // pred_region
          _
        $region48: #{tpu_custom_call.1} parent=31 // pred_fallthru
          _
      $region32: #{tpu_custom_call.1} parent=5 // pred_fallthru
        _
      %p1101 = scmp.le.s32.totalorder 2, %s14
      // Predicated region
      $region49: #{tpu_custom_call.1} parent=5 // pred_check
        %p1102 = pneg %p1101
      $region50: #{tpu_custom_call.1} parent=5 // pred_check_branch
        %1104 = sbr.rel (%p1102) target = $region52
      $region51: #{tpu_custom_call.1} parent=5 // pred_region
        %s1105 = ssub.s32 %s14, 2
        // Predicated region
        $region53: #{tpu_custom_call.1} parent=51 // pred_check
          %p1106 = pneg %p111
        $region54: #{tpu_custom_call.1} parent=51 // pred_check_branch
          %1108 = sbr.rel (%p1106) target = $region56
        $region55: #{tpu_custom_call.1} parent=51 // pred_region
          %p1109 = scmp.lt.s32.totalorder %s20, 1
          %s1110 = scalar_select %p1109, %s20, 1
          %s1111 = smul.addr %s1110, 9
          %s1112 = smul.addr %s1111, 8
          %s1113 = scalar_lea.vmem %s3, %s1112
        $region56: #{tpu_custom_call.1} parent=51 // pred_fallthru
          _
      $region52: #{tpu_custom_call.1} parent=5 // pred_fallthru
        _
    $region6: #{tpu_custom_call.1} parent=1 // loop_footer
      %s18 = sadd.s32 1, %s14
    $region7: #{tpu_custom_call.1} parent=1 // loop_footer_branch
      %13 = sbr.rel target = $region3
    $region8: #{tpu_custom_call.1} parent=1 // loop_exit
      _
    %1114 = vsyncpa [#allocation4], 1
    %s1115 = scalar_lea.sflag [#allocation4], 1
    %1116 = vsyncpa %s1115, 1
    %1117 = vsyncpa [#allocation5], 1
    %s1118 = scalar_lea.sflag [#allocation5], 1
    %1119 = vsyncpa %s1118, 1
    %1120 = vsyncpa [#allocation7], 1

</llo_original>
